<compile_context>
chip_gen: v6e
topology: v6e:2x2x1
jax: 0.10.0
libtpu: 0.0.40
codegen_flags: <defaults>
</compile_context>

<pallas_src>
import functools

import jax
import jax.numpy as jnp
from jax.experimental import pallas as pl
from jax.experimental.pallas import tpu as pltpu


def _net_kernel(ids_ref, w1_ref, b1_ref, w2_ref, b2_ref,
                we_ref, be_ref, mu_ref, out_ref):
    """One batch tile.

    ids_ref : (8, tm//8, 2) int32   phase-major [state_id, action_id] pairs
    out_ref : (tm//8, 8*states) f32 lane-dense packed output slab
    """
    rg = ids_ref.shape[1]          # packed batch rows per tile (tm // 8)
    sa = w1_ref.shape[0]           # states + actions (fused layer-1 input width)
    states = mu_ref.shape[1]

    # Weights stay VMEM-resident across the whole grid; load once per step.
    w1 = w1_ref[...]; b1 = b1_ref[...]
    w2 = w2_ref[...]; b2 = b2_ref[...]
    we = we_ref[...]; be = be_ref[...]
    mu = mu_ref[...]

    # Hoisted: shared column iota for the fused one-hot build.
    col = jax.lax.broadcasted_iota(jnp.int32, (rg, sa), 1)

    # 8 phases: phase k handles batch rows {8*i + k}; its result lands in lanes
    # [k*states, (k+1)*states) so the out block is fully lane-dense.
    for k in range(8):
        ids_k = ids_ref[k]                      # (rg, 2) int32
        s = ids_k[:, 0:1]
        a = ids_k[:, 1:2] + states              # action one-hot columns start at `states`

        # Fused one-hot for concat([s_hot, a_hot]); bf16 directly (exact for 0/1).
        x_hot = ((col == s) | (col == a)).astype(jnp.bfloat16)

        # l1 + ReLU  (bf16 MXU feed, f32 accumulate + f32 elementwise).
        h1 = jnp.dot(x_hot, w1, preferred_element_type=jnp.float32) + b1
        h1 = jnp.maximum(h1, 0.0)

        # l2 + LeakyReLU (negative_slope = 0.01, PyTorch default).
        z2 = jnp.dot(h1.astype(jnp.bfloat16), w2,
                     preferred_element_type=jnp.float32) + b2
        h2 = jnp.where(z2 >= 0, z2, 0.01 * z2)

        # embedding + softmax over the representation dim (exact reciprocal so the
        # output rows are an exact probability simplex).
        z3 = jnp.dot(h2.astype(jnp.bfloat16), we,
                     preferred_element_type=jnp.float32) + be
        z3 = z3 - jnp.max(z3, axis=-1, keepdims=True)
        e3 = jnp.exp(z3)
        phi = e3 / jnp.sum(e3, axis=-1, keepdims=True)

        # Final projection onto the state simplex (softmax(mu) precomputed/hoisted).
        out_ref[:, k * states:(k + 1) * states] = jnp.dot(
            phi, mu, preferred_element_type=jnp.float32)


def _round_up(x, m):
    return (x + m - 1) // m * m


def _choose_tiling(n, block_m):
    """Pick (tile_rows, padded_rows) so padding stays small and grids stay useful."""
    n_eff = max(int(n), 1)
    num_tiles = max(1, -(-n_eff // block_m))         # ceil(n / block_m)
    # v7x has 2 TensorCores: once the batch is big enough that the alignment
    # padding is negligible, keep at least 2 grid steps so both cores get work.
    if n_eff >= 128 and num_tiles < 2:
        num_tiles = 2
    # Multi-tile blocks need tm//8 divisible by 8 (sublane alignment) -> tm % 64 == 0.
    align = 64 if num_tiles > 1 else 8
    tm = _round_up(-(-n_eff // num_tiles), align)
    n_pad = num_tiles * tm
    return tm, n_pad


@functools.partial(jax.jit, static_argnames=("states", "actions", "d", "block_m"))
def net_forward(s, a, params, *, states, actions, d, block_m=2048):
    """s, a: int arrays of shape (N,). Returns (N, states) float32 probabilities."""
    n = s.shape[0]
    w1, b1, w2, b2, we, be, mu_w = params

    # ---- batch-independent parameter prep (once per jit, outside the grid loop) ----
    w1t = w1.T.astype(jnp.bfloat16)              # (states+actions, 120) fused layer-1
    w2t = w2.T.astype(jnp.bfloat16)              # (120, 20)
    wet = we.T.astype(jnp.bfloat16)              # (20, d)
    b1r = b1.reshape(1, -1).astype(jnp.float32)
    b2r = b2.reshape(1, -1).astype(jnp.float32)
    ber = be.reshape(1, -1).astype(jnp.float32)
    soft_mu = jax.nn.softmax(mu_w.astype(jnp.float32), axis=-1)   # (d, states), hoisted

    # ---- batch tiling / id packing ----
    tm, n_pad = _choose_tiling(n, block_m)
    rg = tm // 8                                 # packed rows per tile

    ids = jnp.stack([s.astype(jnp.int32), a.astype(jnp.int32)], axis=-1)   # (N, 2)
    ids = jnp.pad(ids, ((0, n_pad - n), (0, 0)))                           # (n_pad, 2)
    # Phase-major layout: ids3[k, i, :] = ids[8*i + k, :]  (tiny host-side permute).
    ids = ids.reshape(n_pad // 8, 8, 2).transpose(1, 0, 2)                 # (8, n_pad//8, 2)

    resident = lambda arr: pl.BlockSpec(arr.shape, lambda i: (0, 0))       # stays in VMEM

    out_packed = pl.pallas_call(
        _net_kernel,
        out_shape=jax.ShapeDtypeStruct((n_pad // 8, 8 * states), jnp.float32),
        grid=(n_pad // tm,),
        in_specs=[
            pl.BlockSpec((8, rg, 2), lambda i: (0, i, 0)),   # packed s/a ids
            resident(w1t), resident(b1r),
            resident(w2t), resident(b2r),
            resident(wet), resident(ber),
            resident(soft_mu),
        ],
        out_specs=pl.BlockSpec((rg, 8 * states), lambda i: (i, 0)),
        compiler_params=pltpu.CompilerParams(
            dimension_semantics=("parallel",),   # shard batch tiles across TCs (v7x)
            vmem_limit_bytes=32 << 20,
        ),
    )(ids, w1t, b1r, w2t, b2r, wet, ber, soft_mu)

    # Undo the 8-row lane packing: row-major (n_pad//8, 8*states) -> (n_pad, states)
    # is a free view (same memory layout), then drop padded rows.
    return out_packed.reshape(n_pad, states)[:n]


def _init_params(key, states, actions, d):
    """Deterministic init matching the PyTorch module's parameter shapes."""
    ks = jax.random.split(key, 6)

    def linear_init(kw, kb, fan_in, fan_out):
        bound = 1.0 / jnp.sqrt(fan_in)
        w = jax.random.uniform(kw, (fan_out, fan_in), jnp.float32, -bound, bound)
        b = jax.random.uniform(kb, (fan_out,), jnp.float32, -bound, bound)
        return w, b

    w1, b1 = linear_init(ks[0], ks[1], states + actions, 120)
    w2, b2 = linear_init(ks[2], ks[3], 120, 20)
    we, be = linear_init(ks[4], ks[5], 20, d)
    mu_w = jnp.full((d, states), 1.0 / states, jnp.float32)
    return (w1, b1, w2, b2, we, be, mu_w)


def _reference_forward(s, a, params, states, actions):
    """Pure-JAX f32 reference for verification."""
    w1, b1, w2, b2, we, be, mu_w = params
    s_hot = jax.nn.one_hot(s, states, dtype=jnp.float32)
    a_hot = jax.nn.one_hot(a, actions, dtype=jnp.float32)
    x = jnp.concatenate([s_hot, a_hot], axis=-1)
    h1 = jax.nn.relu(x @ w1.T + b1)
    z2 = h1 @ w2.T + b2
    h2 = jnp.where(z2 >= 0, z2, 0.01 * z2)
    phi = jax.nn.softmax(h2 @ we.T + be, axis=-1)
    mu = jax.nn.softmax(mu_w, axis=-1)
    return phi @ mu


if __name__ == "__main__":
    STATES, ACTIONS, D, BATCH = 16, 4, 8, 8

    key = jax.random.PRNGKey(0)
    k_params, k_s, k_a, k_s2, k_a2 = jax.random.split(key, 5)

    params = _init_params(k_params, STATES, ACTIONS, D)
    s = jax.random.randint(k_s, (BATCH,), 0, STATES, dtype=jnp.int32)
    a = jax.random.randint(k_a, (BATCH,), 0, ACTIONS, dtype=jnp.int32)

    out = net_forward(s, a, params, states=STATES, actions=ACTIONS, d=D)
    out = jax.block_until_ready(out)

    ref = _reference_forward(s, a, params, STATES, ACTIONS)
    assert out.shape == (BATCH, STATES)
    # bf16 MXU feeds -> slightly looser tolerance than pure f32.
    assert jnp.allclose(out, ref, atol=2e-3, rtol=2e-2), "mismatch vs reference"
    # each output row is a probability distribution over states
    assert jnp.allclose(jnp.sum(out, axis=-1), 1.0, atol=5e-3)

    # Also exercise the multi-tile / padded path (grid > 1) used for larger batches.
    N2 = 160
    s2 = jax.random.randint(k_s2, (N2,), 0, STATES, dtype=jnp.int32)
    a2 = jax.random.randint(k_a2, (N2,), 0, ACTIONS, dtype=jnp.int32)
    out2 = jax.block_until_ready(
        net_forward(s2, a2, params, states=STATES, actions=ACTIONS, d=D, block_m=128))
    ref2 = _reference_forward(s2, a2, params, STATES, ACTIONS)
    assert out2.shape == (N2, STATES)
    assert jnp.allclose(out2, ref2, atol=2e-3, rtol=2e-2), "mismatch vs reference (tiled)"

    print("KERNEL_OK")
</pallas_src>

<mosaic_0001>
module attributes {stable_mosaic.version = 11 : i64} {
  func.func @_net_kernel(%arg0: i32, %arg1: memref<8x1x2xi32, #tpu.memory_space<vmem>>, %arg2: memref<20x120xbf16, #tpu.memory_space<vmem>>, %arg3: memref<1x120xf32, #tpu.memory_space<vmem>>, %arg4: memref<120x20xbf16, #tpu.memory_space<vmem>>, %arg5: memref<1x20xf32, #tpu.memory_space<vmem>>, %arg6: memref<20x8xbf16, #tpu.memory_space<vmem>>, %arg7: memref<1x8xf32, #tpu.memory_space<vmem>>, %arg8: memref<8x16xf32, #tpu.memory_space<vmem>>, %arg9: memref<1x128xf32, #tpu.memory_space<vmem>>) attributes {dimension_semantics = [#tpu.dimension_semantics<parallel>], iteration_bounds = array<i64: 1>, scalar_prefetch = 0 : i64, scratch_operands = 0 : i64, tpu.core_type = #tpu.core_type<tc>, window_params = [{transform_indices = @transform_0, window_bounds = array<i64: 8, 1, 2>}, {pipeline_mode = #tpu.pipeline_mode<synchronous>, transform_indices = @transform_1, window_bounds = array<i64: 20, 120>}, {pipeline_mode = #tpu.pipeline_mode<synchronous>, transform_indices = @transform_2, window_bounds = array<i64: 1, 120>}, {pipeline_mode = #tpu.pipeline_mode<synchronous>, transform_indices = @transform_3, window_bounds = array<i64: 120, 20>}, {pipeline_mode = #tpu.pipeline_mode<synchronous>, transform_indices = @transform_4, window_bounds = array<i64: 1, 20>}, {pipeline_mode = #tpu.pipeline_mode<synchronous>, transform_indices = @transform_5, window_bounds = array<i64: 20, 8>}, {pipeline_mode = #tpu.pipeline_mode<synchronous>, transform_indices = @transform_6, window_bounds = array<i64: 1, 8>}, {pipeline_mode = #tpu.pipeline_mode<synchronous>, transform_indices = @transform_7, window_bounds = array<i64: 8, 16>}, {transform_indices = @transform_8, window_bounds = array<i64: 1, 128>}]} {
    %c0 = arith.constant 0 : index
    %c0_0 = arith.constant 0 : index
    %0 = vector.load %arg2[%c0, %c0_0] : memref<20x120xbf16, #tpu.memory_space<vmem>>, vector<20x120xbf16>
    %c0_1 = arith.constant 0 : index
    %c0_2 = arith.constant 0 : index
    %1 = vector.load %arg3[%c0_1, %c0_2] : memref<1x120xf32, #tpu.memory_space<vmem>>, vector<1x120xf32>
    %c0_3 = arith.constant 0 : index
    %c0_4 = arith.constant 0 : index
    %2 = vector.load %arg4[%c0_3, %c0_4] : memref<120x20xbf16, #tpu.memory_space<vmem>>, vector<120x20xbf16>
    %c0_5 = arith.constant 0 : index
    %c0_6 = arith.constant 0 : index
    %3 = vector.load %arg5[%c0_5, %c0_6] : memref<1x20xf32, #tpu.memory_space<vmem>>, vector<1x20xf32>
    %c0_7 = arith.constant 0 : index
    %c0_8 = arith.constant 0 : index
    %4 = vector.load %arg6[%c0_7, %c0_8] : memref<20x8xbf16, #tpu.memory_space<vmem>>, vector<20x8xbf16>
    %c0_9 = arith.constant 0 : index
    %c0_10 = arith.constant 0 : index
    %5 = vector.load %arg7[%c0_9, %c0_10] : memref<1x8xf32, #tpu.memory_space<vmem>>, vector<1x8xf32>
    %c0_11 = arith.constant 0 : index
    %c0_12 = arith.constant 0 : index
    %6 = vector.load %arg8[%c0_11, %c0_12] : memref<8x16xf32, #tpu.memory_space<vmem>>, vector<8x16xf32>
    %7 = tpu.iota {dimensions = array<i32: 1>} : vector<1x20xi32>
    %c0_13 = arith.constant 0 : index
    %c0_14 = arith.constant 0 : index
    %c0_15 = arith.constant 0 : index
    %8 = vector.load %arg1[%c0_13, %c0_14, %c0_15] : memref<8x1x2xi32, #tpu.memory_space<vmem>>, vector<1x1x2xi32>
    %9 = vector.shape_cast %8 : vector<1x1x2xi32> to vector<1x2xi32>
    %10 = vector.extract_strided_slice %9 {offsets = [0, 0], sizes = [1, 1], strides = [1, 1]} : vector<1x2xi32> to vector<1x1xi32>
    %11 = vector.extract_strided_slice %9 {offsets = [0, 1], sizes = [1, 1], strides = [1, 1]} : vector<1x2xi32> to vector<1x1xi32>
    %c16_i32 = arith.constant 16 : i32
    %12 = vector.broadcast %c16_i32 : i32 to vector<1x1xi32>
    %13 = arith.addi %11, %12 : vector<1x1xi32>
    %14 = vector.broadcast %10 : vector<1x1xi32> to vector<1x20xi32>
    %15 = arith.cmpi eq, %7, %14 : vector<1x20xi32>
    %16 = vector.broadcast %13 : vector<1x1xi32> to vector<1x20xi32>
    %17 = arith.cmpi eq, %7, %16 : vector<1x20xi32>
    %18 = arith.ori %15, %17 : vector<1x20xi1>
    %19 = arith.extui %18 : vector<1x20xi1> to vector<1x20xi32>
    %20 = arith.sitofp %19 : vector<1x20xi32> to vector<1x20xf32>
    %21 = arith.truncf %20 : vector<1x20xf32> to vector<1x20xbf16>
    %cst = arith.constant dense<0.000000e+00> : vector<1x120xf32>
    %22 = tpu.matmul %21, %0, %cst {dimension_numbers = #tpu.dot_dimension_numbers<[1], [0], [0], [1], [0, 0, 1, 1], [], []>} : vector<1x20xbf16>, vector<20x120xbf16>, vector<1x120xf32> -> vector<1x120xf32>
    %23 = arith.addf %22, %1 : vector<1x120xf32>
    %cst_16 = arith.constant 0.000000e+00 : f32
    %24 = vector.broadcast %cst_16 : f32 to vector<1x120xf32>
    %25 = arith.maximumf %23, %24 : vector<1x120xf32>
    %26 = arith.truncf %25 : vector<1x120xf32> to vector<1x120xbf16>
    %cst_17 = arith.constant dense<0.000000e+00> : vector<1x20xf32>
    %27 = tpu.matmul %26, %2, %cst_17 {dimension_numbers = #tpu.dot_dimension_numbers<[1], [0], [0], [1], [0, 0, 1, 1], [], []>} : vector<1x120xbf16>, vector<120x20xbf16>, vector<1x20xf32> -> vector<1x20xf32>
    %28 = arith.addf %27, %3 : vector<1x20xf32>
    %cst_18 = arith.constant 0.000000e+00 : f32
    %29 = vector.broadcast %cst_18 : f32 to vector<1x20xf32>
    %30 = arith.cmpf oge, %28, %29 : vector<1x20xf32>
    %cst_19 = arith.constant 0.00999999977 : f32
    %31 = vector.broadcast %cst_19 : f32 to vector<1x20xf32>
    %32 = arith.mulf %31, %28 : vector<1x20xf32>
    %33 = arith.select %30, %28, %32 : vector<1x20xi1>, vector<1x20xf32>
    %34 = arith.truncf %33 : vector<1x20xf32> to vector<1x20xbf16>
    %cst_20 = arith.constant dense<0.000000e+00> : vector<1x8xf32>
    %35 = tpu.matmul %34, %4, %cst_20 {dimension_numbers = #tpu.dot_dimension_numbers<[1], [0], [0], [1], [0, 0, 1, 1], [], []>} : vector<1x20xbf16>, vector<20x8xbf16>, vector<1x8xf32> -> vector<1x8xf32>
    %36 = arith.addf %35, %5 : vector<1x8xf32>
    %cst_21 = arith.constant dense<0xFF800000> : vector<1xf32>
    %37 = vector.multi_reduction <maximumf>, %36, %cst_21 [1] : vector<1x8xf32> to vector<1xf32>
    %38 = vector.shape_cast %37 : vector<1xf32> to vector<1x1xf32>
    %39 = vector.broadcast %38 : vector<1x1xf32> to vector<1x8xf32>
    %40 = arith.subf %36, %39 : vector<1x8xf32>
    %41 = math.exp %40 : vector<1x8xf32>
    %cst_22 = arith.constant dense<0.000000e+00> : vector<1xf32>
    %42 = vector.multi_reduction <add>, %41, %cst_22 [1] : vector<1x8xf32> to vector<1xf32>
    %43 = vector.shape_cast %42 : vector<1xf32> to vector<1x1xf32>
    %44 = vector.broadcast %43 : vector<1x1xf32> to vector<1x8xf32>
    %45 = arith.divf %41, %44 : vector<1x8xf32>
    %cst_23 = arith.constant dense<0.000000e+00> : vector<1x16xf32>
    %46 = tpu.matmul %45, %6, %cst_23 {dimension_numbers = #tpu.dot_dimension_numbers<[1], [0], [0], [1], [0, 0, 1, 1], [], []>} : vector<1x8xf32>, vector<8x16xf32>, vector<1x16xf32> -> vector<1x16xf32>
    %c0_24 = arith.constant 0 : index
    %c0_25 = arith.constant 0 : index
    %47 = vector.load %arg9[%c0_24, %c0_25] : memref<1x128xf32, #tpu.memory_space<vmem>>, vector<1x16xf32>
    tpu.vector_store %arg9[%c0_24, %c0_25], %46 {strides = array<i32>} : memref<1x128xf32, #tpu.memory_space<vmem>>, vector<1x16xf32>,
    %c1 = arith.constant 1 : index
    %c0_26 = arith.constant 0 : index
    %c0_27 = arith.constant 0 : index
    %48 = vector.load %arg1[%c1, %c0_26, %c0_27] : memref<8x1x2xi32, #tpu.memory_space<vmem>>, vector<1x1x2xi32>
    %49 = vector.shape_cast %48 : vector<1x1x2xi32> to vector<1x2xi32>
    %50 = vector.extract_strided_slice %49 {offsets = [0, 0], sizes = [1, 1], strides = [1, 1]} : vector<1x2xi32> to vector<1x1xi32>
    %51 = vector.extract_strided_slice %49 {offsets = [0, 1], sizes = [1, 1], strides = [1, 1]} : vector<1x2xi32> to vector<1x1xi32>
    %c16_i32_28 = arith.constant 16 : i32
    %52 = vector.broadcast %c16_i32_28 : i32 to vector<1x1xi32>
    %53 = arith.addi %51, %52 : vector<1x1xi32>
    %54 = vector.broadcast %50 : vector<1x1xi32> to vector<1x20xi32>
    %55 = arith.cmpi eq, %7, %54 : vector<1x20xi32>
    %56 = vector.broadcast %53 : vector<1x1xi32> to vector<1x20xi32>
    %57 = arith.cmpi eq, %7, %56 : vector<1x20xi32>
    %58 = arith.ori %55, %57 : vector<1x20xi1>
    %59 = arith.extui %58 : vector<1x20xi1> to vector<1x20xi32>
    %60 = arith.sitofp %59 : vector<1x20xi32> to vector<1x20xf32>
    %61 = arith.truncf %60 : vector<1x20xf32> to vector<1x20xbf16>
    %cst_29 = arith.constant dense<0.000000e+00> : vector<1x120xf32>
    %62 = tpu.matmul %61, %0, %cst_29 {dimension_numbers = #tpu.dot_dimension_numbers<[1], [0], [0], [1], [0, 0, 1, 1], [], []>} : vector<1x20xbf16>, vector<20x120xbf16>, vector<1x120xf32> -> vector<1x120xf32>
    %63 = arith.addf %62, %1 : vector<1x120xf32>
    %cst_30 = arith.constant 0.000000e+00 : f32
    %64 = vector.broadcast %cst_30 : f32 to vector<1x120xf32>
    %65 = arith.maximumf %63, %64 : vector<1x120xf32>
    %66 = arith.truncf %65 : vector<1x120xf32> to vector<1x120xbf16>
    %cst_31 = arith.constant dense<0.000000e+00> : vector<1x20xf32>
    %67 = tpu.matmul %66, %2, %cst_31 {dimension_numbers = #tpu.dot_dimension_numbers<[1], [0], [0], [1], [0, 0, 1, 1], [], []>} : vector<1x120xbf16>, vector<120x20xbf16>, vector<1x20xf32> -> vector<1x20xf32>
    %68 = arith.addf %67, %3 : vector<1x20xf32>
    %cst_32 = arith.constant 0.000000e+00 : f32
    %69 = vector.broadcast %cst_32 : f32 to vector<1x20xf32>
    %70 = arith.cmpf oge, %68, %69 : vector<1x20xf32>
    %cst_33 = arith.constant 0.00999999977 : f32
    %71 = vector.broadcast %cst_33 : f32 to vector<1x20xf32>
    %72 = arith.mulf %71, %68 : vector<1x20xf32>
    %73 = arith.select %70, %68, %72 : vector<1x20xi1>, vector<1x20xf32>
    %74 = arith.truncf %73 : vector<1x20xf32> to vector<1x20xbf16>
    %cst_34 = arith.constant dense<0.000000e+00> : vector<1x8xf32>
    %75 = tpu.matmul %74, %4, %cst_34 {dimension_numbers = #tpu.dot_dimension_numbers<[1], [0], [0], [1], [0, 0, 1, 1], [], []>} : vector<1x20xbf16>, vector<20x8xbf16>, vector<1x8xf32> -> vector<1x8xf32>
    %76 = arith.addf %75, %5 : vector<1x8xf32>
    %cst_35 = arith.constant dense<0xFF800000> : vector<1xf32>
    %77 = vector.multi_reduction <maximumf>, %76, %cst_35 [1] : vector<1x8xf32> to vector<1xf32>
    %78 = vector.shape_cast %77 : vector<1xf32> to vector<1x1xf32>
    %79 = vector.broadcast %78 : vector<1x1xf32> to vector<1x8xf32>
    %80 = arith.subf %76, %79 : vector<1x8xf32>
    %81 = math.exp %80 : vector<1x8xf32>
    %cst_36 = arith.constant dense<0.000000e+00> : vector<1xf32>
    %82 = vector.multi_reduction <add>, %81, %cst_36 [1] : vector<1x8xf32> to vector<1xf32>
    %83 = vector.shape_cast %82 : vector<1xf32> to vector<1x1xf32>
    %84 = vector.broadcast %83 : vector<1x1xf32> to vector<1x8xf32>
    %85 = arith.divf %81, %84 : vector<1x8xf32>
    %cst_37 = arith.constant dense<0.000000e+00> : vector<1x16xf32>
    %86 = tpu.matmul %85, %6, %cst_37 {dimension_numbers = #tpu.dot_dimension_numbers<[1], [0], [0], [1], [0, 0, 1, 1], [], []>} : vector<1x8xf32>, vector<8x16xf32>, vector<1x16xf32> -> vector<1x16xf32>
    %c0_38 = arith.constant 0 : index
    %c16 = arith.constant 16 : index
    %87 = vector.load %arg9[%c0_38, %c16] : memref<1x128xf32, #tpu.memory_space<vmem>>, vector<1x16xf32>
    tpu.vector_store %arg9[%c0_38, %c16], %86 {strides = array<i32>} : memref<1x128xf32, #tpu.memory_space<vmem>>, vector<1x16xf32>,
    %c2 = arith.constant 2 : index
    %c0_39 = arith.constant 0 : index
    %c0_40 = arith.constant 0 : index
    %88 = vector.load %arg1[%c2, %c0_39, %c0_40] : memref<8x1x2xi32, #tpu.memory_space<vmem>>, vector<1x1x2xi32>
    %89 = vector.shape_cast %88 : vector<1x1x2xi32> to vector<1x2xi32>
    %90 = vector.extract_strided_slice %89 {offsets = [0, 0], sizes = [1, 1], strides = [1, 1]} : vector<1x2xi32> to vector<1x1xi32>
    %91 = vector.extract_strided_slice %89 {offsets = [0, 1], sizes = [1, 1], strides = [1, 1]} : vector<1x2xi32> to vector<1x1xi32>
    %c16_i32_41 = arith.constant 16 : i32
    %92 = vector.broadcast %c16_i32_41 : i32 to vector<1x1xi32>
    %93 = arith.addi %91, %92 : vector<1x1xi32>
    %94 = vector.broadcast %90 : vector<1x1xi32> to vector<1x20xi32>
    %95 = arith.cmpi eq, %7, %94 : vector<1x20xi32>
    %96 = vector.broadcast %93 : vector<1x1xi32> to vector<1x20xi32>
    %97 = arith.cmpi eq, %7, %96 : vector<1x20xi32>
    %98 = arith.ori %95, %97 : vector<1x20xi1>
    %99 = arith.extui %98 : vector<1x20xi1> to vector<1x20xi32>
    %100 = arith.sitofp %99 : vector<1x20xi32> to vector<1x20xf32>
    %101 = arith.truncf %100 : vector<1x20xf32> to vector<1x20xbf16>
    %cst_42 = arith.constant dense<0.000000e+00> : vector<1x120xf32>
    %102 = tpu.matmul %101, %0, %cst_42 {dimension_numbers = #tpu.dot_dimension_numbers<[1], [0], [0], [1], [0, 0, 1, 1], [], []>} : vector<1x20xbf16>, vector<20x120xbf16>, vector<1x120xf32> -> vector<1x120xf32>
    %103 = arith.addf %102, %1 : vector<1x120xf32>
    %cst_43 = arith.constant 0.000000e+00 : f32
    %104 = vector.broadcast %cst_43 : f32 to vector<1x120xf32>
    %105 = arith.maximumf %103, %104 : vector<1x120xf32>
    %106 = arith.truncf %105 : vector<1x120xf32> to vector<1x120xbf16>
    %cst_44 = arith.constant dense<0.000000e+00> : vector<1x20xf32>
    %107 = tpu.matmul %106, %2, %cst_44 {dimension_numbers = #tpu.dot_dimension_numbers<[1], [0], [0], [1], [0, 0, 1, 1], [], []>} : vector<1x120xbf16>, vector<120x20xbf16>, vector<1x20xf32> -> vector<1x20xf32>
    %108 = arith.addf %107, %3 : vector<1x20xf32>
    %cst_45 = arith.constant 0.000000e+00 : f32
    %109 = vector.broadcast %cst_45 : f32 to vector<1x20xf32>
    %110 = arith.cmpf oge, %108, %109 : vector<1x20xf32>
    %cst_46 = arith.constant 0.00999999977 : f32
    %111 = vector.broadcast %cst_46 : f32 to vector<1x20xf32>
    %112 = arith.mulf %111, %108 : vector<1x20xf32>
    %113 = arith.select %110, %108, %112 : vector<1x20xi1>, vector<1x20xf32>
    %114 = arith.truncf %113 : vector<1x20xf32> to vector<1x20xbf16>
    %cst_47 = arith.constant dense<0.000000e+00> : vector<1x8xf32>
    %115 = tpu.matmul %114, %4, %cst_47 {dimension_numbers = #tpu.dot_dimension_numbers<[1], [0], [0], [1], [0, 0, 1, 1], [], []>} : vector<1x20xbf16>, vector<20x8xbf16>, vector<1x8xf32> -> vector<1x8xf32>
    %116 = arith.addf %115, %5 : vector<1x8xf32>
    %cst_48 = arith.constant dense<0xFF800000> : vector<1xf32>
    %117 = vector.multi_reduction <maximumf>, %116, %cst_48 [1] : vector<1x8xf32> to vector<1xf32>
    %118 = vector.shape_cast %117 : vector<1xf32> to vector<1x1xf32>
    %119 = vector.broadcast %118 : vector<1x1xf32> to vector<1x8xf32>
    %120 = arith.subf %116, %119 : vector<1x8xf32>
    %121 = math.exp %120 : vector<1x8xf32>
    %cst_49 = arith.constant dense<0.000000e+00> : vector<1xf32>
    %122 = vector.multi_reduction <add>, %121, %cst_49 [1] : vector<1x8xf32> to vector<1xf32>
    %123 = vector.shape_cast %122 : vector<1xf32> to vector<1x1xf32>
    %124 = vector.broadcast %123 : vector<1x1xf32> to vector<1x8xf32>
    %125 = arith.divf %121, %124 : vector<1x8xf32>
    %cst_50 = arith.constant dense<0.000000e+00> : vector<1x16xf32>
    %126 = tpu.matmul %125, %6, %cst_50 {dimension_numbers = #tpu.dot_dimension_numbers<[1], [0], [0], [1], [0, 0, 1, 1], [], []>} : vector<1x8xf32>, vector<8x16xf32>, vector<1x16xf32> -> vector<1x16xf32>
    %c0_51 = arith.constant 0 : index
    %c32 = arith.constant 32 : index
    %127 = vector.load %arg9[%c0_51, %c32] : memref<1x128xf32, #tpu.memory_space<vmem>>, vector<1x16xf32>
    tpu.vector_store %arg9[%c0_51, %c32], %126 {strides = array<i32>} : memref<1x128xf32, #tpu.memory_space<vmem>>, vector<1x16xf32>,
    %c3 = arith.constant 3 : index
    %c0_52 = arith.constant 0 : index
    %c0_53 = arith.constant 0 : index
    %128 = vector.load %arg1[%c3, %c0_52, %c0_53] : memref<8x1x2xi32, #tpu.memory_space<vmem>>, vector<1x1x2xi32>
    %129 = vector.shape_cast %128 : vector<1x1x2xi32> to vector<1x2xi32>
    %130 = vector.extract_strided_slice %129 {offsets = [0, 0], sizes = [1, 1], strides = [1, 1]} : vector<1x2xi32> to vector<1x1xi32>
    %131 = vector.extract_strided_slice %129 {offsets = [0, 1], sizes = [1, 1], strides = [1, 1]} : vector<1x2xi32> to vector<1x1xi32>
    %c16_i32_54 = arith.constant 16 : i32
    %132 = vector.broadcast %c16_i32_54 : i32 to vector<1x1xi32>
    %133 = arith.addi %131, %132 : vector<1x1xi32>
    %134 = vector.broadcast %130 : vector<1x1xi32> to vector<1x20xi32>
    %135 = arith.cmpi eq, %7, %134 : vector<1x20xi32>
    %136 = vector.broadcast %133 : vector<1x1xi32> to vector<1x20xi32>
    %137 = arith.cmpi eq, %7, %136 : vector<1x20xi32>
    %138 = arith.ori %135, %137 : vector<1x20xi1>
    %139 = arith.extui %138 : vector<1x20xi1> to vector<1x20xi32>
    %140 = arith.sitofp %139 : vector<1x20xi32> to vector<1x20xf32>
    %141 = arith.truncf %140 : vector<1x20xf32> to vector<1x20xbf16>
    %cst_55 = arith.constant dense<0.000000e+00> : vector<1x120xf32>
    %142 = tpu.matmul %141, %0, %cst_55 {dimension_numbers = #tpu.dot_dimension_numbers<[1], [0], [0], [1], [0, 0, 1, 1], [], []>} : vector<1x20xbf16>, vector<20x120xbf16>, vector<1x120xf32> -> vector<1x120xf32>
    %143 = arith.addf %142, %1 : vector<1x120xf32>
    %cst_56 = arith.constant 0.000000e+00 : f32
    %144 = vector.broadcast %cst_56 : f32 to vector<1x120xf32>
    %145 = arith.maximumf %143, %144 : vector<1x120xf32>
    %146 = arith.truncf %145 : vector<1x120xf32> to vector<1x120xbf16>
    %cst_57 = arith.constant dense<0.000000e+00> : vector<1x20xf32>
    %147 = tpu.matmul %146, %2, %cst_57 {dimension_numbers = #tpu.dot_dimension_numbers<[1], [0], [0], [1], [0, 0, 1, 1], [], []>} : vector<1x120xbf16>, vector<120x20xbf16>, vector<1x20xf32> -> vector<1x20xf32>
    %148 = arith.addf %147, %3 : vector<1x20xf32>
    %cst_58 = arith.constant 0.000000e+00 : f32
    %149 = vector.broadcast %cst_58 : f32 to vector<1x20xf32>
    %150 = arith.cmpf oge, %148, %149 : vector<1x20xf32>
    %cst_59 = arith.constant 0.00999999977 : f32
    %151 = vector.broadcast %cst_59 : f32 to vector<1x20xf32>
    %152 = arith.mulf %151, %148 : vector<1x20xf32>
    %153 = arith.select %150, %148, %152 : vector<1x20xi1>, vector<1x20xf32>
    %154 = arith.truncf %153 : vector<1x20xf32> to vector<1x20xbf16>
    %cst_60 = arith.constant dense<0.000000e+00> : vector<1x8xf32>
    %155 = tpu.matmul %154, %4, %cst_60 {dimension_numbers = #tpu.dot_dimension_numbers<[1], [0], [0], [1], [0, 0, 1, 1], [], []>} : vector<1x20xbf16>, vector<20x8xbf16>, vector<1x8xf32> -> vector<1x8xf32>
    %156 = arith.addf %155, %5 : vector<1x8xf32>
    %cst_61 = arith.constant dense<0xFF800000> : vector<1xf32>
    %157 = vector.multi_reduction <maximumf>, %156, %cst_61 [1] : vector<1x8xf32> to vector<1xf32>
    %158 = vector.shape_cast %157 : vector<1xf32> to vector<1x1xf32>
    %159 = vector.broadcast %158 : vector<1x1xf32> to vector<1x8xf32>
    %160 = arith.subf %156, %159 : vector<1x8xf32>
    %161 = math.exp %160 : vector<1x8xf32>
    %cst_62 = arith.constant dense<0.000000e+00> : vector<1xf32>
    %162 = vector.multi_reduction <add>, %161, %cst_62 [1] : vector<1x8xf32> to vector<1xf32>
    %163 = vector.shape_cast %162 : vector<1xf32> to vector<1x1xf32>
    %164 = vector.broadcast %163 : vector<1x1xf32> to vector<1x8xf32>
    %165 = arith.divf %161, %164 : vector<1x8xf32>
    %cst_63 = arith.constant dense<0.000000e+00> : vector<1x16xf32>
    %166 = tpu.matmul %165, %6, %cst_63 {dimension_numbers = #tpu.dot_dimension_numbers<[1], [0], [0], [1], [0, 0, 1, 1], [], []>} : vector<1x8xf32>, vector<8x16xf32>, vector<1x16xf32> -> vector<1x16xf32>
    %c0_64 = arith.constant 0 : index
    %c48 = arith.constant 48 : index
    %167 = vector.load %arg9[%c0_64, %c48] : memref<1x128xf32, #tpu.memory_space<vmem>>, vector<1x16xf32>
    tpu.vector_store %arg9[%c0_64, %c48], %166 {strides = array<i32>} : memref<1x128xf32, #tpu.memory_space<vmem>>, vector<1x16xf32>,
    %c4 = arith.constant 4 : index
    %c0_65 = arith.constant 0 : index
    %c0_66 = arith.constant 0 : index
    %168 = vector.load %arg1[%c4, %c0_65, %c0_66] : memref<8x1x2xi32, #tpu.memory_space<vmem>>, vector<1x1x2xi32>
    %169 = vector.shape_cast %168 : vector<1x1x2xi32> to vector<1x2xi32>
    %170 = vector.extract_strided_slice %169 {offsets = [0, 0], sizes = [1, 1], strides = [1, 1]} : vector<1x2xi32> to vector<1x1xi32>
    %171 = vector.extract_strided_slice %169 {offsets = [0, 1], sizes = [1, 1], strides = [1, 1]} : vector<1x2xi32> to vector<1x1xi32>
    %c16_i32_67 = arith.constant 16 : i32
    %172 = vector.broadcast %c16_i32_67 : i32 to vector<1x1xi32>
    %173 = arith.addi %171, %172 : vector<1x1xi32>
    %174 = vector.broadcast %170 : vector<1x1xi32> to vector<1x20xi32>
    %175 = arith.cmpi eq, %7, %174 : vector<1x20xi32>
    %176 = vector.broadcast %173 : vector<1x1xi32> to vector<1x20xi32>
    %177 = arith.cmpi eq, %7, %176 : vector<1x20xi32>
    %178 = arith.ori %175, %177 : vector<1x20xi1>
    %179 = arith.extui %178 : vector<1x20xi1> to vector<1x20xi32>
    %180 = arith.sitofp %179 : vector<1x20xi32> to vector<1x20xf32>
    %181 = arith.truncf %180 : vector<1x20xf32> to vector<1x20xbf16>
    %cst_68 = arith.constant dense<0.000000e+00> : vector<1x120xf32>
    %182 = tpu.matmul %181, %0, %cst_68 {dimension_numbers = #tpu.dot_dimension_numbers<[1], [0], [0], [1], [0, 0, 1, 1], [], []>} : vector<1x20xbf16>, vector<20x120xbf16>, vector<1x120xf32> -> vector<1x120xf32>
    %183 = arith.addf %182, %1 : vector<1x120xf32>
    %cst_69 = arith.constant 0.000000e+00 : f32
    %184 = vector.broadcast %cst_69 : f32 to vector<1x120xf32>
    %185 = arith.maximumf %183, %184 : vector<1x120xf32>
    %186 = arith.truncf %185 : vector<1x120xf32> to vector<1x120xbf16>
    %cst_70 = arith.constant dense<0.000000e+00> : vector<1x20xf32>
    %187 = tpu.matmul %186, %2, %cst_70 {dimension_numbers = #tpu.dot_dimension_numbers<[1], [0], [0], [1], [0, 0, 1, 1], [], []>} : vector<1x120xbf16>, vector<120x20xbf16>, vector<1x20xf32> -> vector<1x20xf32>
    %188 = arith.addf %187, %3 : vector<1x20xf32>
    %cst_71 = arith.constant 0.000000e+00 : f32
    %189 = vector.broadcast %cst_71 : f32 to vector<1x20xf32>
    %190 = arith.cmpf oge, %188, %189 : vector<1x20xf32>
    %cst_72 = arith.constant 0.00999999977 : f32
    %191 = vector.broadcast %cst_72 : f32 to vector<1x20xf32>
    %192 = arith.mulf %191, %188 : vector<1x20xf32>
    %193 = arith.select %190, %188, %192 : vector<1x20xi1>, vector<1x20xf32>
    %194 = arith.truncf %193 : vector<1x20xf32> to vector<1x20xbf16>
    %cst_73 = arith.constant dense<0.000000e+00> : vector<1x8xf32>
    %195 = tpu.matmul %194, %4, %cst_73 {dimension_numbers = #tpu.dot_dimension_numbers<[1], [0], [0], [1], [0, 0, 1, 1], [], []>} : vector<1x20xbf16>, vector<20x8xbf16>, vector<1x8xf32> -> vector<1x8xf32>
    %196 = arith.addf %195, %5 : vector<1x8xf32>
    %cst_74 = arith.constant dense<0xFF800000> : vector<1xf32>
    %197 = vector.multi_reduction <maximumf>, %196, %cst_74 [1] : vector<1x8xf32> to vector<1xf32>
    %198 = vector.shape_cast %197 : vector<1xf32> to vector<1x1xf32>
    %199 = vector.broadcast %198 : vector<1x1xf32> to vector<1x8xf32>
    %200 = arith.subf %196, %199 : vector<1x8xf32>
    %201 = math.exp %200 : vector<1x8xf32>
    %cst_75 = arith.constant dense<0.000000e+00> : vector<1xf32>
    %202 = vector.multi_reduction <add>, %201, %cst_75 [1] : vector<1x8xf32> to vector<1xf32>
    %203 = vector.shape_cast %202 : vector<1xf32> to vector<1x1xf32>
    %204 = vector.broadcast %203 : vector<1x1xf32> to vector<1x8xf32>
    %205 = arith.divf %201, %204 : vector<1x8xf32>
    %cst_76 = arith.constant dense<0.000000e+00> : vector<1x16xf32>
    %206 = tpu.matmul %205, %6, %cst_76 {dimension_numbers = #tpu.dot_dimension_numbers<[1], [0], [0], [1], [0, 0, 1, 1], [], []>} : vector<1x8xf32>, vector<8x16xf32>, vector<1x16xf32> -> vector<1x16xf32>
    %c0_77 = arith.constant 0 : index
    %c64 = arith.constant 64 : index
    %207 = vector.load %arg9[%c0_77, %c64] : memref<1x128xf32, #tpu.memory_space<vmem>>, vector<1x16xf32>
    tpu.vector_store %arg9[%c0_77, %c64], %206 {strides = array<i32>} : memref<1x128xf32, #tpu.memory_space<vmem>>, vector<1x16xf32>,
    %c5 = arith.constant 5 : index
    %c0_78 = arith.constant 0 : index
    %c0_79 = arith.constant 0 : index
    %208 = vector.load %arg1[%c5, %c0_78, %c0_79] : memref<8x1x2xi32, #tpu.memory_space<vmem>>, vector<1x1x2xi32>
    %209 = vector.shape_cast %208 : vector<1x1x2xi32> to vector<1x2xi32>
    %210 = vector.extract_strided_slice %209 {offsets = [0, 0], sizes = [1, 1], strides = [1, 1]} : vector<1x2xi32> to vector<1x1xi32>
    %211 = vector.extract_strided_slice %209 {offsets = [0, 1], sizes = [1, 1], strides = [1, 1]} : vector<1x2xi32> to vector<1x1xi32>
    %c16_i32_80 = arith.constant 16 : i32
    %212 = vector.broadcast %c16_i32_80 : i32 to vector<1x1xi32>
    %213 = arith.addi %211, %212 : vector<1x1xi32>
    %214 = vector.broadcast %210 : vector<1x1xi32> to vector<1x20xi32>
    %215 = arith.cmpi eq, %7, %214 : vector<1x20xi32>
    %216 = vector.broadcast %213 : vector<1x1xi32> to vector<1x20xi32>
    %217 = arith.cmpi eq, %7, %216 : vector<1x20xi32>
    %218 = arith.ori %215, %217 : vector<1x20xi1>
    %219 = arith.extui %218 : vector<1x20xi1> to vector<1x20xi32>
    %220 = arith.sitofp %219 : vector<1x20xi32> to vector<1x20xf32>
    %221 = arith.truncf %220 : vector<1x20xf32> to vector<1x20xbf16>
    %cst_81 = arith.constant dense<0.000000e+00> : vector<1x120xf32>
    %222 = tpu.matmul %221, %0, %cst_81 {dimension_numbers = #tpu.dot_dimension_numbers<[1], [0], [0], [1], [0, 0, 1, 1], [], []>} : vector<1x20xbf16>, vector<20x120xbf16>, vector<1x120xf32> -> vector<1x120xf32>
    %223 = arith.addf %222, %1 : vector<1x120xf32>
    %cst_82 = arith.constant 0.000000e+00 : f32
    %224 = vector.broadcast %cst_82 : f32 to vector<1x120xf32>
    %225 = arith.maximumf %223, %224 : vector<1x120xf32>
    %226 = arith.truncf %225 : vector<1x120xf32> to vector<1x120xbf16>
    %cst_83 = arith.constant dense<0.000000e+00> : vector<1x20xf32>
    %227 = tpu.matmul %226, %2, %cst_83 {dimension_numbers = #tpu.dot_dimension_numbers<[1], [0], [0], [1], [0, 0, 1, 1], [], []>} : vector<1x120xbf16>, vector<120x20xbf16>, vector<1x20xf32> -> vector<1x20xf32>
    %228 = arith.addf %227, %3 : vector<1x20xf32>
    %cst_84 = arith.constant 0.000000e+00 : f32
    %229 = vector.broadcast %cst_84 : f32 to vector<1x20xf32>
    %230 = arith.cmpf oge, %228, %229 : vector<1x20xf32>
    %cst_85 = arith.constant 0.00999999977 : f32
    %231 = vector.broadcast %cst_85 : f32 to vector<1x20xf32>
    %232 = arith.mulf %231, %228 : vector<1x20xf32>
    %233 = arith.select %230, %228, %232 : vector<1x20xi1>, vector<1x20xf32>
    %234 = arith.truncf %233 : vector<1x20xf32> to vector<1x20xbf16>
    %cst_86 = arith.constant dense<0.000000e+00> : vector<1x8xf32>
    %235 = tpu.matmul %234, %4, %cst_86 {dimension_numbers = #tpu.dot_dimension_numbers<[1], [0], [0], [1], [0, 0, 1, 1], [], []>} : vector<1x20xbf16>, vector<20x8xbf16>, vector<1x8xf32> -> vector<1x8xf32>
    %236 = arith.addf %235, %5 : vector<1x8xf32>
    %cst_87 = arith.constant dense<0xFF800000> : vector<1xf32>
    %237 = vector.multi_reduction <maximumf>, %236, %cst_87 [1] : vector<1x8xf32> to vector<1xf32>
    %238 = vector.shape_cast %237 : vector<1xf32> to vector<1x1xf32>
    %239 = vector.broadcast %238 : vector<1x1xf32> to vector<1x8xf32>
    %240 = arith.subf %236, %239 : vector<1x8xf32>
    %241 = math.exp %240 : vector<1x8xf32>
    %cst_88 = arith.constant dense<0.000000e+00> : vector<1xf32>
    %242 = vector.multi_reduction <add>, %241, %cst_88 [1] : vector<1x8xf32> to vector<1xf32>
    %243 = vector.shape_cast %242 : vector<1xf32> to vector<1x1xf32>
    %244 = vector.broadcast %243 : vector<1x1xf32> to vector<1x8xf32>
    %245 = arith.divf %241, %244 : vector<1x8xf32>
    %cst_89 = arith.constant dense<0.000000e+00> : vector<1x16xf32>
    %246 = tpu.matmul %245, %6, %cst_89 {dimension_numbers = #tpu.dot_dimension_numbers<[1], [0], [0], [1], [0, 0, 1, 1], [], []>} : vector<1x8xf32>, vector<8x16xf32>, vector<1x16xf32> -> vector<1x16xf32>
    %c0_90 = arith.constant 0 : index
    %c80 = arith.constant 80 : index
    %247 = vector.load %arg9[%c0_90, %c80] : memref<1x128xf32, #tpu.memory_space<vmem>>, vector<1x16xf32>
    tpu.vector_store %arg9[%c0_90, %c80], %246 {strides = array<i32>} : memref<1x128xf32, #tpu.memory_space<vmem>>, vector<1x16xf32>,
    %c6 = arith.constant 6 : index
    %c0_91 = arith.constant 0 : index
    %c0_92 = arith.constant 0 : index
    %248 = vector.load %arg1[%c6, %c0_91, %c0_92] : memref<8x1x2xi32, #tpu.memory_space<vmem>>, vector<1x1x2xi32>
    %249 = vector.shape_cast %248 : vector<1x1x2xi32> to vector<1x2xi32>
    %250 = vector.extract_strided_slice %249 {offsets = [0, 0], sizes = [1, 1], strides = [1, 1]} : vector<1x2xi32> to vector<1x1xi32>
    %251 = vector.extract_strided_slice %249 {offsets = [0, 1], sizes = [1, 1], strides = [1, 1]} : vector<1x2xi32> to vector<1x1xi32>
    %c16_i32_93 = arith.constant 16 : i32
    %252 = vector.broadcast %c16_i32_93 : i32 to vector<1x1xi32>
    %253 = arith.addi %251, %252 : vector<1x1xi32>
    %254 = vector.broadcast %250 : vector<1x1xi32> to vector<1x20xi32>
    %255 = arith.cmpi eq, %7, %254 : vector<1x20xi32>
    %256 = vector.broadcast %253 : vector<1x1xi32> to vector<1x20xi32>
    %257 = arith.cmpi eq, %7, %256 : vector<1x20xi32>
    %258 = arith.ori %255, %257 : vector<1x20xi1>
    %259 = arith.extui %258 : vector<1x20xi1> to vector<1x20xi32>
    %260 = arith.sitofp %259 : vector<1x20xi32> to vector<1x20xf32>
    %261 = arith.truncf %260 : vector<1x20xf32> to vector<1x20xbf16>
    %cst_94 = arith.constant dense<0.000000e+00> : vector<1x120xf32>
    %262 = tpu.matmul %261, %0, %cst_94 {dimension_numbers = #tpu.dot_dimension_numbers<[1], [0], [0], [1], [0, 0, 1, 1], [], []>} : vector<1x20xbf16>, vector<20x120xbf16>, vector<1x120xf32> -> vector<1x120xf32>
    %263 = arith.addf %262, %1 : vector<1x120xf32>
    %cst_95 = arith.constant 0.000000e+00 : f32
    %264 = vector.broadcast %cst_95 : f32 to vector<1x120xf32>
    %265 = arith.maximumf %263, %264 : vector<1x120xf32>
    %266 = arith.truncf %265 : vector<1x120xf32> to vector<1x120xbf16>
    %cst_96 = arith.constant dense<0.000000e+00> : vector<1x20xf32>
    %267 = tpu.matmul %266, %2, %cst_96 {dimension_numbers = #tpu.dot_dimension_numbers<[1], [0], [0], [1], [0, 0, 1, 1], [], []>} : vector<1x120xbf16>, vector<120x20xbf16>, vector<1x20xf32> -> vector<1x20xf32>
    %268 = arith.addf %267, %3 : vector<1x20xf32>
    %cst_97 = arith.constant 0.000000e+00 : f32
    %269 = vector.broadcast %cst_97 : f32 to vector<1x20xf32>
    %270 = arith.cmpf oge, %268, %269 : vector<1x20xf32>
    %cst_98 = arith.constant 0.00999999977 : f32
    %271 = vector.broadcast %cst_98 : f32 to vector<1x20xf32>
    %272 = arith.mulf %271, %268 : vector<1x20xf32>
    %273 = arith.select %270, %268, %272 : vector<1x20xi1>, vector<1x20xf32>
    %274 = arith.truncf %273 : vector<1x20xf32> to vector<1x20xbf16>
    %cst_99 = arith.constant dense<0.000000e+00> : vector<1x8xf32>
    %275 = tpu.matmul %274, %4, %cst_99 {dimension_numbers = #tpu.dot_dimension_numbers<[1], [0], [0], [1], [0, 0, 1, 1], [], []>} : vector<1x20xbf16>, vector<20x8xbf16>, vector<1x8xf32> -> vector<1x8xf32>
    %276 = arith.addf %275, %5 : vector<1x8xf32>
    %cst_100 = arith.constant dense<0xFF800000> : vector<1xf32>
    %277 = vector.multi_reduction <maximumf>, %276, %cst_100 [1] : vector<1x8xf32> to vector<1xf32>
    %278 = vector.shape_cast %277 : vector<1xf32> to vector<1x1xf32>
    %279 = vector.broadcast %278 : vector<1x1xf32> to vector<1x8xf32>
    %280 = arith.subf %276, %279 : vector<1x8xf32>
    %281 = math.exp %280 : vector<1x8xf32>
    %cst_101 = arith.constant dense<0.000000e+00> : vector<1xf32>
    %282 = vector.multi_reduction <add>, %281, %cst_101 [1] : vector<1x8xf32> to vector<1xf32>
    %283 = vector.shape_cast %282 : vector<1xf32> to vector<1x1xf32>
    %284 = vector.broadcast %283 : vector<1x1xf32> to vector<1x8xf32>
    %285 = arith.divf %281, %284 : vector<1x8xf32>
    %cst_102 = arith.constant dense<0.000000e+00> : vector<1x16xf32>
    %286 = tpu.matmul %285, %6, %cst_102 {dimension_numbers = #tpu.dot_dimension_numbers<[1], [0], [0], [1], [0, 0, 1, 1], [], []>} : vector<1x8xf32>, vector<8x16xf32>, vector<1x16xf32> -> vector<1x16xf32>
    %c0_103 = arith.constant 0 : index
    %c96 = arith.constant 96 : index
    %287 = vector.load %arg9[%c0_103, %c96] : memref<1x128xf32, #tpu.memory_space<vmem>>, vector<1x16xf32>
    tpu.vector_store %arg9[%c0_103, %c96], %286 {strides = array<i32>} : memref<1x128xf32, #tpu.memory_space<vmem>>, vector<1x16xf32>,
    %c7 = arith.constant 7 : index
    %c0_104 = arith.constant 0 : index
    %c0_105 = arith.constant 0 : index
    %288 = vector.load %arg1[%c7, %c0_104, %c0_105] : memref<8x1x2xi32, #tpu.memory_space<vmem>>, vector<1x1x2xi32>
    %289 = vector.shape_cast %288 : vector<1x1x2xi32> to vector<1x2xi32>
    %290 = vector.extract_strided_slice %289 {offsets = [0, 0], sizes = [1, 1], strides = [1, 1]} : vector<1x2xi32> to vector<1x1xi32>
    %291 = vector.extract_strided_slice %289 {offsets = [0, 1], sizes = [1, 1], strides = [1, 1]} : vector<1x2xi32> to vector<1x1xi32>
    %c16_i32_106 = arith.constant 16 : i32
    %292 = vector.broadcast %c16_i32_106 : i32 to vector<1x1xi32>
    %293 = arith.addi %291, %292 : vector<1x1xi32>
    %294 = vector.broadcast %290 : vector<1x1xi32> to vector<1x20xi32>
    %295 = arith.cmpi eq, %7, %294 : vector<1x20xi32>
    %296 = vector.broadcast %293 : vector<1x1xi32> to vector<1x20xi32>
    %297 = arith.cmpi eq, %7, %296 : vector<1x20xi32>
    %298 = arith.ori %295, %297 : vector<1x20xi1>
    %299 = arith.extui %298 : vector<1x20xi1> to vector<1x20xi32>
    %300 = arith.sitofp %299 : vector<1x20xi32> to vector<1x20xf32>
    %301 = arith.truncf %300 : vector<1x20xf32> to vector<1x20xbf16>
    %cst_107 = arith.constant dense<0.000000e+00> : vector<1x120xf32>
    %302 = tpu.matmul %301, %0, %cst_107 {dimension_numbers = #tpu.dot_dimension_numbers<[1], [0], [0], [1], [0, 0, 1, 1], [], []>} : vector<1x20xbf16>, vector<20x120xbf16>, vector<1x120xf32> -> vector<1x120xf32>
    %303 = arith.addf %302, %1 : vector<1x120xf32>
    %cst_108 = arith.constant 0.000000e+00 : f32
    %304 = vector.broadcast %cst_108 : f32 to vector<1x120xf32>
    %305 = arith.maximumf %303, %304 : vector<1x120xf32>
    %306 = arith.truncf %305 : vector<1x120xf32> to vector<1x120xbf16>
    %cst_109 = arith.constant dense<0.000000e+00> : vector<1x20xf32>
    %307 = tpu.matmul %306, %2, %cst_109 {dimension_numbers = #tpu.dot_dimension_numbers<[1], [0], [0], [1], [0, 0, 1, 1], [], []>} : vector<1x120xbf16>, vector<120x20xbf16>, vector<1x20xf32> -> vector<1x20xf32>
    %308 = arith.addf %307, %3 : vector<1x20xf32>
    %cst_110 = arith.constant 0.000000e+00 : f32
    %309 = vector.broadcast %cst_110 : f32 to vector<1x20xf32>
    %310 = arith.cmpf oge, %308, %309 : vector<1x20xf32>
    %cst_111 = arith.constant 0.00999999977 : f32
    %311 = vector.broadcast %cst_111 : f32 to vector<1x20xf32>
    %312 = arith.mulf %311, %308 : vector<1x20xf32>
    %313 = arith.select %310, %308, %312 : vector<1x20xi1>, vector<1x20xf32>
    %314 = arith.truncf %313 : vector<1x20xf32> to vector<1x20xbf16>
    %cst_112 = arith.constant dense<0.000000e+00> : vector<1x8xf32>
    %315 = tpu.matmul %314, %4, %cst_112 {dimension_numbers = #tpu.dot_dimension_numbers<[1], [0], [0], [1], [0, 0, 1, 1], [], []>} : vector<1x20xbf16>, vector<20x8xbf16>, vector<1x8xf32> -> vector<1x8xf32>
    %316 = arith.addf %315, %5 : vector<1x8xf32>
    %cst_113 = arith.constant dense<0xFF800000> : vector<1xf32>
    %317 = vector.multi_reduction <maximumf>, %316, %cst_113 [1] : vector<1x8xf32> to vector<1xf32>
    %318 = vector.shape_cast %317 : vector<1xf32> to vector<1x1xf32>
    %319 = vector.broadcast %318 : vector<1x1xf32> to vector<1x8xf32>
    %320 = arith.subf %316, %319 : vector<1x8xf32>
    %321 = math.exp %320 : vector<1x8xf32>
    %cst_114 = arith.constant dense<0.000000e+00> : vector<1xf32>
    %322 = vector.multi_reduction <add>, %321, %cst_114 [1] : vector<1x8xf32> to vector<1xf32>
    %323 = vector.shape_cast %322 : vector<1xf32> to vector<1x1xf32>
    %324 = vector.broadcast %323 : vector<1x1xf32> to vector<1x8xf32>
    %325 = arith.divf %321, %324 : vector<1x8xf32>
    %cst_115 = arith.constant dense<0.000000e+00> : vector<1x16xf32>
    %326 = tpu.matmul %325, %6, %cst_115 {dimension_numbers = #tpu.dot_dimension_numbers<[1], [0], [0], [1], [0, 0, 1, 1], [], []>} : vector<1x8xf32>, vector<8x16xf32>, vector<1x16xf32> -> vector<1x16xf32>
    %c0_116 = arith.constant 0 : index
    %c112 = arith.constant 112 : index
    %327 = vector.load %arg9[%c0_116, %c112] : memref<1x128xf32, #tpu.memory_space<vmem>>, vector<1x16xf32>
    tpu.vector_store %arg9[%c0_116, %c112], %326 {strides = array<i32>} : memref<1x128xf32, #tpu.memory_space<vmem>>, vector<1x16xf32>,
    return
  }
  func.func @transform_0(%arg0: i32) -> (i32, i32, i32) {
    %c0_i32 = arith.constant 0 : i32
    %c0_i32_0 = arith.constant 0 : i32
    %c0_i32_1 = arith.constant 0 : i32
    return %c0_i32, %arg0, %c0_i32_0 : i32, i32, i32
  }
  func.func @transform_1(%arg0: i32) -> (i32, i32) {
    %c0_i32 = arith.constant 0 : i32
    %c0_i32_0 = arith.constant 0 : i32
    %c0_i32_1 = arith.constant 0 : i32
    return %c0_i32, %c0_i32_0 : i32, i32
  }
  func.func @transform_2(%arg0: i32) -> (i32, i32) {
    %c0_i32 = arith.constant 0 : i32
    %c0_i32_0 = arith.constant 0 : i32
    %c0_i32_1 = arith.constant 0 : i32
    return %c0_i32, %c0_i32_0 : i32, i32
  }
  func.func @transform_3(%arg0: i32) -> (i32, i32) {
    %c0_i32 = arith.constant 0 : i32
    %c0_i32_0 = arith.constant 0 : i32
    %c0_i32_1 = arith.constant 0 : i32
    return %c0_i32, %c0_i32_0 : i32, i32
  }
  func.func @transform_4(%arg0: i32) -> (i32, i32) {
    %c0_i32 = arith.constant 0 : i32
    %c0_i32_0 = arith.constant 0 : i32
    %c0_i32_1 = arith.constant 0 : i32
    return %c0_i32, %c0_i32_0 : i32, i32
  }
  func.func @transform_5(%arg0: i32) -> (i32, i32) {
    %c0_i32 = arith.constant 0 : i32
    %c0_i32_0 = arith.constant 0 : i32
    %c0_i32_1 = arith.constant 0 : i32
    return %c0_i32, %c0_i32_0 : i32, i32
  }
  func.func @transform_6(%arg0: i32) -> (i32, i32) {
    %c0_i32 = arith.constant 0 : i32
    %c0_i32_0 = arith.constant 0 : i32
    %c0_i32_1 = arith.constant 0 : i32
    return %c0_i32, %c0_i32_0 : i32, i32
  }
  func.func @transform_7(%arg0: i32) -> (i32, i32) {
    %c0_i32 = arith.constant 0 : i32
    %c0_i32_0 = arith.constant 0 : i32
    %c0_i32_1 = arith.constant 0 : i32
    return %c0_i32, %c0_i32_0 : i32, i32
  }
  func.func @transform_8(%arg0: i32) -> (i32, i32) {
    %c0_i32 = arith.constant 0 : i32
    %c0_i32_0 = arith.constant 0 : i32
    return %arg0, %c0_i32 : i32, i32
  }
}

</mosaic_0001>

<llo_original>
// kernel: net_forward.1
$region0: #{net_forward.1}
  #allocation0 [shape = 'u32[]', space=smem, size = 0x4, offset = 0x4, fixed_abs, tag = 'smem constant byte address 0x4 - core index']
  #allocation1 [shape = 'u32[144,128]{1,0:T(1,128)}', space=vmem, size = 0x12000, scoped, tag = 'internal scratch']
  %s0 = inlined_call_operand.vmem [shape: s32[8,1,2], index: 0, kind: input, shape index: {}]
  %s1 = inlined_call_operand.vmem [shape: bf16[20,120], index: 1, kind: input, shape index: {}]
  %s2 = inlined_call_operand.vmem [shape: f32[1,120], index: 2, kind: input, shape index: {}]
  %s3 = inlined_call_operand.vmem [shape: bf16[120,20], index: 3, kind: input, shape index: {}]
  %s4 = inlined_call_operand.vmem [shape: f32[1,20], index: 4, kind: input, shape index: {}]
  %s5 = inlined_call_operand.vmem [shape: bf16[20,8], index: 5, kind: input, shape index: {}]
  %s6 = inlined_call_operand.vmem [shape: f32[1,8], index: 6, kind: input, shape index: {}]
  %s7 = inlined_call_operand.vmem [shape: f32[8,16], index: 7, kind: input, shape index: {}]
  %s8 = inlined_call_operand.vmem [shape: f32[1,128], index: 8, kind: output, shape index: {}]
  %s9 = sld [smem:[#allocation0]]
  $region42: #{net_forward.1} parent=0
    _
  %s11 = ssub.s32 1, %s9
  %s12 = scalar_select 0, %s11, %s9
  // Predicated region
  $region2: #{net_forward.1} parent=0 // pred_check
    _
  $region3: #{net_forward.1} parent=0 // pred_check_branch
    %14 = sbr.rel (0) target = $region5
  $region4: #{net_forward.1} parent=0 // pred_region
    _
  $region5: #{net_forward.1} parent=0 // pred_fallthru
    _
  // Predicated region
  $region6: #{net_forward.1} parent=0 // pred_check
    _
  $region7: #{net_forward.1} parent=0 // pred_check_branch
    %16 = sbr.rel (0) target = $region9
  $region8: #{net_forward.1} parent=0 // pred_region
    _
  $region9: #{net_forward.1} parent=0 // pred_fallthru
    _
  // Predicated region
  $region10: #{net_forward.1} parent=0 // pred_check
    _
  $region11: #{net_forward.1} parent=0 // pred_check_branch
    %18 = sbr.rel (0) target = $region13
  $region12: #{net_forward.1} parent=0 // pred_region
    _
  $region13: #{net_forward.1} parent=0 // pred_fallthru
    _
  // Predicated region
  $region14: #{net_forward.1} parent=0 // pred_check
    _
  $region15: #{net_forward.1} parent=0 // pred_check_branch
    %20 = sbr.rel (0) target = $region17
  $region16: #{net_forward.1} parent=0 // pred_region
    _
  $region17: #{net_forward.1} parent=0 // pred_fallthru
    _
  // Predicated region
  $region18: #{net_forward.1} parent=0 // pred_check
    _
  $region19: #{net_forward.1} parent=0 // pred_check_branch
    %22 = sbr.rel (0) target = $region21
  $region20: #{net_forward.1} parent=0 // pred_region
    _
  $region21: #{net_forward.1} parent=0 // pred_fallthru
    _
  // Predicated region
  $region22: #{net_forward.1} parent=0 // pred_check
    _
  $region23: #{net_forward.1} parent=0 // pred_check_branch
    %24 = sbr.rel (0) target = $region25
  $region24: #{net_forward.1} parent=0 // pred_region
    _
  $region25: #{net_forward.1} parent=0 // pred_fallthru
    _
  // Predicated region
  $region26: #{net_forward.1} parent=0 // pred_check
    _
  $region27: #{net_forward.1} parent=0 // pred_check_branch
    %26 = sbr.rel (0) target = $region29
  $region28: #{net_forward.1} parent=0 // pred_region
    _
  $region29: #{net_forward.1} parent=0 // pred_fallthru
    _
  // Predicated region
  $region30: #{net_forward.1} parent=0 // pred_check
    _
  $region31: #{net_forward.1} parent=0 // pred_check_branch
    %28 = sbr.rel (0) target = $region33
  $region32: #{net_forward.1} parent=0 // pred_region
    _
  $region33: #{net_forward.1} parent=0 // pred_fallthru
    _
  %v30 = vld [vmem:[%s1] sm:$0xf]
  %v31 = vld [vmem:[%s1 + $0x4] sm:$0xf]
  %v32 = vld [vmem:[%s1 + $0x8] sm:$0x3]
  %v33 = vld [vmem:[%s2] sm:$0x1]
  %v34 = vld [vmem:[%s3] sm:$0xf]
  %v35 = vld [vmem:[%s3 + $0x4] sm:$0xf]
  %v36 = vld [vmem:[%s3 + $0x8] sm:$0xf]
  %v37 = vld [vmem:[%s3 + $0xc] sm:$0xf]
  %v38 = vld [vmem:[%s3 + $0x10] sm:$0xf]
  %v39 = vld [vmem:[%s3 + $0x14] sm:$0xf]
  %v40 = vld [vmem:[%s3 + $0x18] sm:$0xf]
  %v41 = vld [vmem:[%s3 + $0x1c] sm:$0xf]
  %v42 = vld [vmem:[%s3 + $0x20] sm:$0xf]
  %v43 = vld [vmem:[%s3 + $0x24] sm:$0xf]
  %v44 = vld [vmem:[%s3 + $0x28] sm:$0xf]
  %v45 = vld [vmem:[%s3 + $0x2c] sm:$0xf]
  %v46 = vld [vmem:[%s3 + $0x30] sm:$0xf]
  %v47 = vld [vmem:[%s3 + $0x34] sm:$0xf]
  %v48 = vld [vmem:[%s3 + $0x38] sm:$0xf]
  %v49 = vld [vmem:[%s4] sm:$0x1]
  %v50 = vld [vmem:[%s5] sm:$0xf]
  %v51 = vld [vmem:[%s5 + $0x4] sm:$0xf]
  %v52 = vld [vmem:[%s5 + $0x8] sm:$0x3]
  %v53 = vld [vmem:[%s6] sm:$0x1]
  %v54 = vld [vmem:[%s7] sm:$0xff]
  %v55 = vlaneseq
  %v56 = vand.u32 %v55, 127
  %v57 = vld [vmem:[%s0] sm:$0x1]
  %v58 = vadd.s32 %v57, 16
  %59 = vset.pattern.permute.xlu0 0
  %60 = vperm.xlu0 %59, %v57
  %v61 = vpop.permute.xlu0 %60
  %v62 = vlaneseq
  %v63 = vshrl.u32 %v62, 7
  %v64 = vsub.s32 0, %v63
  %v65 = vrot.slane %v61, %v64
  %vm66 = vcmp.eq.s32.totalorder %v56, %v65
  %67 = vset.pattern.permute.xlu0 1
  %68 = vperm.xlu0 %67, %v58
  %v69 = vpop.permute.xlu0 %68
  %v70 = vlaneseq
  %v71 = vshrl.u32 %v70, 7
  %v72 = vsub.s32 0, %v71
  %v73 = vrot.slane %v69, %v72
  %vm74 = vcmp.eq.s32.totalorder %v56, %v73
  %vm75 = vmor %vm66, %vm74
  %v76 = vsel %vm75, 1, 0
  %v77 = vcvt.s32.f32 %v76
  %v78 = vpack.c.bf16 %v77, %v77
  %v82 = vunpack.c.l.b16 %v30
  %v83 = vunpack.c.l.b16 %v31
  %v84 = vunpack.c.l.b16 %v32
  %v85 = vpack.c.b16 %v83, %v82
  %v86 = vpack.c.b16 %v84, %v84
  %vm88 = vcmask 162816
  %v90 = vsel %vm88, %v78, 0
  %vm92 = vcmask 1041408
  %v94 = vsel %vm92, %v86, 0
  %96 = vmatprep.subr.bf16.mxu0 0
  %97 = vmatpush1.bf16.msra.mxu0 0
  %98 = vmatprep.subr.bf16.mxu0 0
  %99 = vmatpush1.bf16.msra.mxu0 0
  %100 = vmatprep.subr.bf16.mxu0 0
  %101 = vmatpush1.bf16.msra.mxu0 0
  %102 = vmatprep.subr.bf16.mxu0 0
  %103 = vmatpush1.bf16.msra.mxu0 0
  %104 = vmatprep.subr.bf16.mxu0 0
  %105 = vmatpush1.bf16.msra.mxu0 0
  %106 = vmatprep.subr.bf16.mxu0 0
  %107 = vmatpush1.bf16.msra.mxu0 0
  %108 = vmatprep.subr.bf16.mxu0 0
  %109 = vmatpush1.bf16.msra.mxu0 %v94
  %110 = vmatprep.subr.bf16.mxu0 0
  %111 = vmatpush1.bf16.msra.mxu0 %v85
  %112 = vmatprep.subr.bf16.mxu0 0
  %113 = vmatpush2.bf16.msra.mxu0 0
  %114 = vmatprep.subr.bf16.mxu0 0
  %115 = vmatpush2.bf16.msra.mxu0 0
  %116 = vmatprep.subr.bf16.mxu0 0
  %117 = vmatpush2.bf16.msra.mxu0 0
  %118 = vmatprep.subr.bf16.mxu0 0
  %119 = vmatpush2.bf16.msra.mxu0 0
  %120 = vmatprep.subr.bf16.mxu0 0
  %121 = vmatpush2.bf16.msra.mxu0 0
  %122 = vmatprep.subr.bf16.mxu0 0
  %123 = vmatpush2.bf16.msra.mxu0 0
  %124 = vmatprep.subr.bf16.mxu0 0
  %125 = vmatpush2.bf16.msra.mxu0 0
  %126 = vmatprep.subr.bf16.mxu0 0
  %127 = vmatpush2.bf16.msra.mxu0 0
  %128 = vmatprep.mubr.bf16.mxu0 0
  %129 = vmatmul.mubr.bf16.gmra.mxu0 %v90
  %v130 = vpop.f32.mrf.mxu0
  %v131 = vadd.f32 %v33, %v130
  %v132 = vpop.f32.mrf.mxu0
  %v133 = vpop.f32.mrf.mxu0
  %v134 = vpop.f32.mrf.mxu0
  %135 = vdwg.mxu0
  %v136 = vmax.f32 %v131, 0.0
  %v137 = vpack.c.bf16 %v136, %v136
  %v153 = vunpack.c.l.b16 %v34
  %v154 = vunpack.c.l.b16 %v35
  %v155 = vunpack.c.l.b16 %v36
  %v156 = vunpack.c.l.b16 %v37
  %v157 = vunpack.c.l.b16 %v38
  %v158 = vunpack.c.l.b16 %v39
  %v159 = vunpack.c.l.b16 %v40
  %v160 = vunpack.c.l.b16 %v41
  %v161 = vunpack.c.l.b16 %v42
  %v162 = vunpack.c.l.b16 %v43
  %v163 = vunpack.c.l.b16 %v44
  %v164 = vunpack.c.l.b16 %v45
  %v165 = vunpack.c.l.b16 %v46
  %v166 = vunpack.c.l.b16 %v47
  %v167 = vunpack.c.l.b16 %v48
  %v168 = vpack.c.b16 %v154, %v153
  %v169 = vpack.c.b16 %v156, %v155
  %v170 = vpack.c.b16 %v158, %v157
  %v171 = vpack.c.b16 %v160, %v159
  %v172 = vpack.c.b16 %v162, %v161
  %v173 = vpack.c.b16 %v164, %v163
  %v174 = vpack.c.b16 %v166, %v165
  %v175 = vpack.c.b16 %v167, %v167
  %vm183 = vcmask 982016
  %v185 = vsel %vm183, %v137, 0
  %vm187 = vcmask 1043456
  %v189 = vsel %vm187, %v175, 0
  %191 = vmatprep.subr.bf16.mxu0 0
  %192 = vmatpush1.bf16.msra.mxu0 %v189
  %193 = vmatprep.subr.bf16.mxu0 0
  %194 = vmatpush1.bf16.msra.mxu0 %v174
  %195 = vmatprep.subr.bf16.mxu0 0
  %196 = vmatpush1.bf16.msra.mxu0 %v173
  %197 = vmatprep.subr.bf16.mxu0 0
  %198 = vmatpush1.bf16.msra.mxu0 %v172
  %199 = vmatprep.subr.bf16.mxu0 0
  %200 = vmatpush1.bf16.msra.mxu0 %v171
  %201 = vmatprep.subr.bf16.mxu0 0
  %202 = vmatpush1.bf16.msra.mxu0 %v170
  %203 = vmatprep.subr.bf16.mxu0 0
  %204 = vmatpush1.bf16.msra.mxu0 %v169
  %205 = vmatprep.subr.bf16.mxu0 0
  %206 = vmatpush1.bf16.msra.mxu0 %v168
  %207 = vmatprep.subr.bf16.mxu0 0
  %208 = vmatpush2.bf16.msra.mxu0 0
  %209 = vmatprep.subr.bf16.mxu0 0
  %210 = vmatpush2.bf16.msra.mxu0 0
  %211 = vmatprep.subr.bf16.mxu0 0
  %212 = vmatpush2.bf16.msra.mxu0 0
  %213 = vmatprep.subr.bf16.mxu0 0
  %214 = vmatpush2.bf16.msra.mxu0 0
  %215 = vmatprep.subr.bf16.mxu0 0
  %216 = vmatpush2.bf16.msra.mxu0 0
  %217 = vmatprep.subr.bf16.mxu0 0
  %218 = vmatpush2.bf16.msra.mxu0 0
  %219 = vmatprep.subr.bf16.mxu0 0
  %220 = vmatpush2.bf16.msra.mxu0 0
  %221 = vmatprep.subr.bf16.mxu0 0
  %222 = vmatpush2.bf16.msra.mxu0 0
  %223 = vmatprep.mubr.bf16.mxu0 0
  %224 = vmatmul.mubr.bf16.gmra.mxu0 %v185
  %v225 = vpop.f32.mrf.mxu0
  %v226 = vadd.f32 %v49, %v225
  %v227 = vpop.f32.mrf.mxu0
  %v228 = vpop.f32.mrf.mxu0
  %v229 = vpop.f32.mrf.mxu0
  %230 = vdwg.mxu0
  %vm231 = vcmp.ge.f32.partialorder %v226, 0.0
  %v232 = vmul.f32 %v226, 0.01
  %v233 = vsel %vm231, %v226, %v232
  %v234 = vpack.c.bf16 %v233, %v233
  %v238 = vunpack.c.l.b16 %v50
  %v239 = vunpack.c.l.b16 %v51
  %v240 = vunpack.c.l.b16 %v52
  %v241 = vpack.c.b16 %v239, %v238
  %v242 = vpack.c.b16 %v240, %v240
  %v245 = vsel %vm88, %v234, 0
  %v248 = vsel %vm92, %v242, 0
  %250 = vmatprep.subr.bf16.mxu0 0
  %251 = vmatpush1.bf16.msra.mxu0 0
  %252 = vmatprep.subr.bf16.mxu0 0
  %253 = vmatpush1.bf16.msra.mxu0 0
  %254 = vmatprep.subr.bf16.mxu0 0
  %255 = vmatpush1.bf16.msra.mxu0 0
  %256 = vmatprep.subr.bf16.mxu0 0
  %257 = vmatpush1.bf16.msra.mxu0 0
  %258 = vmatprep.subr.bf16.mxu0 0
  %259 = vmatpush1.bf16.msra.mxu0 0
  %260 = vmatprep.subr.bf16.mxu0 0
  %261 = vmatpush1.bf16.msra.mxu0 0
  %262 = vmatprep.subr.bf16.mxu0 0
  %263 = vmatpush1.bf16.msra.mxu0 %v248
  %264 = vmatprep.subr.bf16.mxu0 0
  %265 = vmatpush1.bf16.msra.mxu0 %v241
  %266 = vmatprep.subr.bf16.mxu0 0
  %267 = vmatpush2.bf16.msra.mxu0 0
  %268 = vmatprep.subr.bf16.mxu0 0
  %269 = vmatpush2.bf16.msra.mxu0 0
  %270 = vmatprep.subr.bf16.mxu0 0
  %271 = vmatpush2.bf16.msra.mxu0 0
  %272 = vmatprep.subr.bf16.mxu0 0
  %273 = vmatpush2.bf16.msra.mxu0 0
  %274 = vmatprep.subr.bf16.mxu0 0
  %275 = vmatpush2.bf16.msra.mxu0 0
  %276 = vmatprep.subr.bf16.mxu0 0
  %277 = vmatpush2.bf16.msra.mxu0 0
  %278 = vmatprep.subr.bf16.mxu0 0
  %279 = vmatpush2.bf16.msra.mxu0 0
  %280 = vmatprep.subr.bf16.mxu0 0
  %281 = vmatpush2.bf16.msra.mxu0 0
  %282 = vmatprep.mubr.bf16.mxu0 0
  %283 = vmatmul.mubr.bf16.gmra.mxu0 %v245
  %v284 = vpop.f32.mrf.mxu0
  %v285 = vadd.f32 %v53, %v284
  %v286 = vpop.f32.mrf.mxu0
  %v287 = vpop.f32.mrf.mxu0
  %v288 = vpop.f32.mrf.mxu0
  %289 = vdwg.mxu0
  %vm290 = vcmask 57344
  %v291 = vsel %vm290, %v285, -inf
  %292 = vmax.xlane.f32.xlu0 %v291
  %v293 = vpop.xlane.xlu0 %292
  %v294 = vsub.f32 %v285, %v293
  %v295 = vmul.f32 %v294, 1.442695
  %v296 = vpow.pop %v295
  %v297 = vsel %vm290, %v296, 0.0
  %298 = vadd.xlane.f32.xlu0 %v297
  %v299 = vpop.xlane.xlu0 %298
  %v300 = vrcp.pop %v299
  %v301 = vmul.f32 %v296, %v300
  %vm302 = vcmask 64512
  %v304 = vsel %vm302, %v301, 0
  %306 = vmatprep.subr.mxu0 0.0
  %307 = vmatpush1.msra.mxu0 0.0
  %308 = vmatprep.subr.mxu0 0.0
  %309 = vmatpush1.msra.mxu0 0.0
  %310 = vmatprep.subr.mxu0 0.0
  %311 = vmatpush1.msra.mxu0 0.0
  %312 = vmatprep.subr.mxu0 0.0
  %313 = vmatpush1.msra.mxu0 0.0
  %314 = vmatprep.subr.mxu0 0.0
  %315 = vmatpush1.msra.mxu0 0.0
  %316 = vmatprep.subr.mxu0 0.0
  %317 = vmatpush1.msra.mxu0 0.0
  %318 = vmatprep.subr.mxu0 0.0
  %319 = vmatpush1.msra.mxu0 0.0
  %320 = vmatprep.subr.mxu0 0.0
  %321 = vmatpush1.msra.mxu0 0.0
  %322 = vmatprep.subr.mxu0 0.0
  %323 = vmatpush1.msra.mxu0 0.0
  %324 = vmatprep.subr.mxu0 0.0
  %325 = vmatpush1.msra.mxu0 0.0
  %326 = vmatprep.subr.mxu0 0.0
  %327 = vmatpush1.msra.mxu0 0.0
  %328 = vmatprep.subr.mxu0 0.0
  %329 = vmatpush1.msra.mxu0 0.0
  %330 = vmatprep.subr.mxu0 0.0
  %331 = vmatpush1.msra.mxu0 0.0
  %332 = vmatprep.subr.mxu0 0.0
  %333 = vmatpush1.msra.mxu0 0.0
  %334 = vmatprep.subr.mxu0 0.0
  %335 = vmatpush1.msra.mxu0 0.0
  %336 = vmatprep.subr.mxu0 0.0
  %337 = vmatpush1.msra.mxu0 %v54
  %338 = vmatprep.subr.mxu0 0.0
  %339 = vmatpush2.msra.mxu0 0.0
  %340 = vmatprep.subr.mxu0 0.0
  %341 = vmatpush2.msra.mxu0 0.0
  %342 = vmatprep.subr.mxu0 0.0
  %343 = vmatpush2.msra.mxu0 0.0
  %344 = vmatprep.subr.mxu0 0.0
  %345 = vmatpush2.msra.mxu0 0.0
  %346 = vmatprep.subr.mxu0 0.0
  %347 = vmatpush2.msra.mxu0 0.0
  %348 = vmatprep.subr.mxu0 0.0
  %349 = vmatpush2.msra.mxu0 0.0
  %350 = vmatprep.subr.mxu0 0.0
  %351 = vmatpush2.msra.mxu0 0.0
  %352 = vmatprep.subr.mxu0 0.0
  %353 = vmatpush2.msra.mxu0 0.0
  %354 = vmatprep.subr.mxu0 0.0
  %355 = vmatpush2.msra.mxu0 0.0
  %356 = vmatprep.subr.mxu0 0.0
  %357 = vmatpush2.msra.mxu0 0.0
  %358 = vmatprep.subr.mxu0 0.0
  %359 = vmatpush2.msra.mxu0 0.0
  %360 = vmatprep.subr.mxu0 0.0
  %361 = vmatpush2.msra.mxu0 0.0
  %362 = vmatprep.subr.mxu0 0.0
  %363 = vmatpush2.msra.mxu0 0.0
  %364 = vmatprep.subr.mxu0 0.0
  %365 = vmatpush2.msra.mxu0 0.0
  %366 = vmatprep.subr.mxu0 0.0
  %367 = vmatpush2.msra.mxu0 0.0
  %368 = vmatprep.subr.mxu0 0.0
  %369 = vmatpush2.msra.mxu0 0.0
  %370 = vmatprep.mubr.f32.mxu0 0.0
  %371 = vmatmul.mubr.f32.gmra.mxu0 %v304
  %v372 = vpop.f32.mrf.mxu0
  %v373 = vadd.f32 0.0, %v372
  %v374 = vpop.f32.mrf.mxu0
  %375 = vdwg.mxu0
  %vm376 = vcmask 122880
  %377 = vst.msk [vmem:[%s8] sm:$0x1] %vm376, %v373
  %s378 = scalar_lea.vmem %s0, 1
  %v379 = vld [vmem:[%s378] sm:$0x1]
  %v380 = vadd.s32 %v379, 16
  %381 = vset.pattern.permute.xlu0 0
  %382 = vperm.xlu0 %381, %v379
  %v383 = vpop.permute.xlu0 %382
  %v384 = vlaneseq
  %v385 = vshrl.u32 %v384, 7
  %v386 = vsub.s32 0, %v385
  %v387 = vrot.slane %v383, %v386
  %vm388 = vcmp.eq.s32.totalorder %v56, %v387
  %389 = vset.pattern.permute.xlu0 1
  %390 = vperm.xlu0 %389, %v380
  %v391 = vpop.permute.xlu0 %390
  %v392 = vlaneseq
  %v393 = vshrl.u32 %v392, 7
  %v394 = vsub.s32 0, %v393
  %v395 = vrot.slane %v391, %v394
  %vm396 = vcmp.eq.s32.totalorder %v56, %v395
  %vm397 = vmor %vm388, %vm396
  %v398 = vsel %vm397, 1, 0
  %v399 = vcvt.s32.f32 %v398
  %v400 = vpack.c.bf16 %v399, %v399
  %v402 = vsel %vm88, %v400, 0
  %404 = vmatprep.subr.bf16.mxu0 0
  %405 = vmatpush1.bf16.msra.mxu0 0
  %406 = vmatprep.subr.bf16.mxu0 0
  %407 = vmatpush1.bf16.msra.mxu0 0
  %408 = vmatprep.subr.bf16.mxu0 0
  %409 = vmatpush1.bf16.msra.mxu0 0
  %410 = vmatprep.subr.bf16.mxu0 0
  %411 = vmatpush1.bf16.msra.mxu0 0
  %412 = vmatprep.subr.bf16.mxu0 0
  %413 = vmatpush1.bf16.msra.mxu0 0
  %414 = vmatprep.subr.bf16.mxu0 0
  %415 = vmatpush1.bf16.msra.mxu0 0
  %416 = vmatprep.subr.bf16.mxu0 0
  %417 = vmatpush1.bf16.msra.mxu0 %v94
  %418 = vmatprep.subr.bf16.mxu0 0
  %419 = vmatpush1.bf16.msra.mxu0 %v85
  %420 = vmatprep.subr.bf16.mxu0 0
  %421 = vmatpush2.bf16.msra.mxu0 0
  %422 = vmatprep.subr.bf16.mxu0 0
  %423 = vmatpush2.bf16.msra.mxu0 0
  %424 = vmatprep.subr.bf16.mxu0 0
  %425 = vmatpush2.bf16.msra.mxu0 0
  %426 = vmatprep.subr.bf16.mxu0 0
  %427 = vmatpush2.bf16.msra.mxu0 0
  %428 = vmatprep.subr.bf16.mxu0 0
  %429 = vmatpush2.bf16.msra.mxu0 0
  %430 = vmatprep.subr.bf16.mxu0 0
  %431 = vmatpush2.bf16.msra.mxu0 0
  %432 = vmatprep.subr.bf16.mxu0 0
  %433 = vmatpush2.bf16.msra.mxu0 0
  %434 = vmatprep.subr.bf16.mxu0 0
  %435 = vmatpush2.bf16.msra.mxu0 0
  %436 = vmatprep.mubr.bf16.mxu0 0
  %437 = vmatmul.mubr.bf16.gmra.mxu0 %v402
  %v438 = vpop.f32.mrf.mxu0
  %v439 = vadd.f32 %v33, %v438
  %v440 = vpop.f32.mrf.mxu0
  %v441 = vpop.f32.mrf.mxu0
  %v442 = vpop.f32.mrf.mxu0
  %443 = vdwg.mxu0
  %v444 = vmax.f32 %v439, 0.0
  %v445 = vpack.c.bf16 %v444, %v444
  %v447 = vsel %vm183, %v445, 0
  %449 = vmatprep.subr.bf16.mxu0 0
  %450 = vmatpush1.bf16.msra.mxu0 %v189
  %451 = vmatprep.subr.bf16.mxu0 0
  %452 = vmatpush1.bf16.msra.mxu0 %v174
  %453 = vmatprep.subr.bf16.mxu0 0
  %454 = vmatpush1.bf16.msra.mxu0 %v173
  %455 = vmatprep.subr.bf16.mxu0 0
  %456 = vmatpush1.bf16.msra.mxu0 %v172
  %457 = vmatprep.subr.bf16.mxu0 0
  %458 = vmatpush1.bf16.msra.mxu0 %v171
  %459 = vmatprep.subr.bf16.mxu0 0
  %460 = vmatpush1.bf16.msra.mxu0 %v170
  %461 = vmatprep.subr.bf16.mxu0 0
  %462 = vmatpush1.bf16.msra.mxu0 %v169
  %463 = vmatprep.subr.bf16.mxu0 0
  %464 = vmatpush1.bf16.msra.mxu0 %v168
  %465 = vmatprep.subr.bf16.mxu0 0
  %466 = vmatpush2.bf16.msra.mxu0 0
  %467 = vmatprep.subr.bf16.mxu0 0
  %468 = vmatpush2.bf16.msra.mxu0 0
  %469 = vmatprep.subr.bf16.mxu0 0
  %470 = vmatpush2.bf16.msra.mxu0 0
  %471 = vmatprep.subr.bf16.mxu0 0
  %472 = vmatpush2.bf16.msra.mxu0 0
  %473 = vmatprep.subr.bf16.mxu0 0
  %474 = vmatpush2.bf16.msra.mxu0 0
  %475 = vmatprep.subr.bf16.mxu0 0
  %476 = vmatpush2.bf16.msra.mxu0 0
  %477 = vmatprep.subr.bf16.mxu0 0
  %478 = vmatpush2.bf16.msra.mxu0 0
  %479 = vmatprep.subr.bf16.mxu0 0
  %480 = vmatpush2.bf16.msra.mxu0 0
  %481 = vmatprep.mubr.bf16.mxu0 0
  %482 = vmatmul.mubr.bf16.gmra.mxu0 %v447
  %v483 = vpop.f32.mrf.mxu0
  %v484 = vadd.f32 %v49, %v483
  %v485 = vpop.f32.mrf.mxu0
  %v486 = vpop.f32.mrf.mxu0
  %v487 = vpop.f32.mrf.mxu0
  %488 = vdwg.mxu0
  %vm489 = vcmp.ge.f32.partialorder %v484, 0.0
  %v490 = vmul.f32 %v484, 0.01
  %v491 = vsel %vm489, %v484, %v490
  %v492 = vpack.c.bf16 %v491, %v491
  %v494 = vsel %vm88, %v492, 0
  %496 = vmatprep.subr.bf16.mxu0 0
  %497 = vmatpush1.bf16.msra.mxu0 0
  %498 = vmatprep.subr.bf16.mxu0 0
  %499 = vmatpush1.bf16.msra.mxu0 0
  %500 = vmatprep.subr.bf16.mxu0 0
  %501 = vmatpush1.bf16.msra.mxu0 0
  %502 = vmatprep.subr.bf16.mxu0 0
  %503 = vmatpush1.bf16.msra.mxu0 0
  %504 = vmatprep.subr.bf16.mxu0 0
  %505 = vmatpush1.bf16.msra.mxu0 0
  %506 = vmatprep.subr.bf16.mxu0 0
  %507 = vmatpush1.bf16.msra.mxu0 0
  %508 = vmatprep.subr.bf16.mxu0 0
  %509 = vmatpush1.bf16.msra.mxu0 %v248
  %510 = vmatprep.subr.bf16.mxu0 0
  %511 = vmatpush1.bf16.msra.mxu0 %v241
  %512 = vmatprep.subr.bf16.mxu0 0
  %513 = vmatpush2.bf16.msra.mxu0 0
  %514 = vmatprep.subr.bf16.mxu0 0
  %515 = vmatpush2.bf16.msra.mxu0 0
  %516 = vmatprep.subr.bf16.mxu0 0
  %517 = vmatpush2.bf16.msra.mxu0 0
  %518 = vmatprep.subr.bf16.mxu0 0
  %519 = vmatpush2.bf16.msra.mxu0 0
  %520 = vmatprep.subr.bf16.mxu0 0
  %521 = vmatpush2.bf16.msra.mxu0 0
  %522 = vmatprep.subr.bf16.mxu0 0
  %523 = vmatpush2.bf16.msra.mxu0 0
  %524 = vmatprep.subr.bf16.mxu0 0
  %525 = vmatpush2.bf16.msra.mxu0 0
  %526 = vmatprep.subr.bf16.mxu0 0
  %527 = vmatpush2.bf16.msra.mxu0 0
  %528 = vmatprep.mubr.bf16.mxu0 0
  %529 = vmatmul.mubr.bf16.gmra.mxu0 %v494
  %v530 = vpop.f32.mrf.mxu0
  %v531 = vadd.f32 %v53, %v530
  %v532 = vpop.f32.mrf.mxu0
  %v533 = vpop.f32.mrf.mxu0
  %v534 = vpop.f32.mrf.mxu0
  %535 = vdwg.mxu0
  %v536 = vsel %vm290, %v531, -inf
  %537 = vmax.xlane.f32.xlu0 %v536
  %v538 = vpop.xlane.xlu0 %537
  %v539 = vsub.f32 %v531, %v538
  %v540 = vmul.f32 %v539, 1.442695
  %v541 = vpow.pop %v540
  %v542 = vsel %vm290, %v541, 0.0
  %543 = vadd.xlane.f32.xlu0 %v542
  %v544 = vpop.xlane.xlu0 %543
  %v545 = vrcp.pop %v544
  %v546 = vmul.f32 %v541, %v545
  %v548 = vsel %vm302, %v546, 0
  %550 = vmatprep.subr.mxu0 0.0
  %551 = vmatpush1.msra.mxu0 0.0
  %552 = vmatprep.subr.mxu0 0.0
  %553 = vmatpush1.msra.mxu0 0.0
  %554 = vmatprep.subr.mxu0 0.0
  %555 = vmatpush1.msra.mxu0 0.0
  %556 = vmatprep.subr.mxu0 0.0
  %557 = vmatpush1.msra.mxu0 0.0
  %558 = vmatprep.subr.mxu0 0.0
  %559 = vmatpush1.msra.mxu0 0.0
  %560 = vmatprep.subr.mxu0 0.0
  %561 = vmatpush1.msra.mxu0 0.0
  %562 = vmatprep.subr.mxu0 0.0
  %563 = vmatpush1.msra.mxu0 0.0
  %564 = vmatprep.subr.mxu0 0.0
  %565 = vmatpush1.msra.mxu0 0.0
  %566 = vmatprep.subr.mxu0 0.0
  %567 = vmatpush1.msra.mxu0 0.0
  %568 = vmatprep.subr.mxu0 0.0
  %569 = vmatpush1.msra.mxu0 0.0
  %570 = vmatprep.subr.mxu0 0.0
  %571 = vmatpush1.msra.mxu0 0.0
  %572 = vmatprep.subr.mxu0 0.0
  %573 = vmatpush1.msra.mxu0 0.0
  %574 = vmatprep.subr.mxu0 0.0
  %575 = vmatpush1.msra.mxu0 0.0
  %576 = vmatprep.subr.mxu0 0.0
  %577 = vmatpush1.msra.mxu0 0.0
  %578 = vmatprep.subr.mxu0 0.0
  %579 = vmatpush1.msra.mxu0 0.0
  %580 = vmatprep.subr.mxu0 0.0
  %581 = vmatpush1.msra.mxu0 %v54
  %582 = vmatprep.subr.mxu0 0.0
  %583 = vmatpush2.msra.mxu0 0.0
  %584 = vmatprep.subr.mxu0 0.0
  %585 = vmatpush2.msra.mxu0 0.0
  %586 = vmatprep.subr.mxu0 0.0
  %587 = vmatpush2.msra.mxu0 0.0
  %588 = vmatprep.subr.mxu0 0.0
  %589 = vmatpush2.msra.mxu0 0.0
  %590 = vmatprep.subr.mxu0 0.0
  %591 = vmatpush2.msra.mxu0 0.0
  %592 = vmatprep.subr.mxu0 0.0
  %593 = vmatpush2.msra.mxu0 0.0
  %594 = vmatprep.subr.mxu0 0.0
  %595 = vmatpush2.msra.mxu0 0.0
  %596 = vmatprep.subr.mxu0 0.0
  %597 = vmatpush2.msra.mxu0 0.0
  %598 = vmatprep.subr.mxu0 0.0
  %599 = vmatpush2.msra.mxu0 0.0
  %600 = vmatprep.subr.mxu0 0.0
  %601 = vmatpush2.msra.mxu0 0.0
  %602 = vmatprep.subr.mxu0 0.0
  %603 = vmatpush2.msra.mxu0 0.0
  %604 = vmatprep.subr.mxu0 0.0
  %605 = vmatpush2.msra.mxu0 0.0
  %606 = vmatprep.subr.mxu0 0.0
  %607 = vmatpush2.msra.mxu0 0.0
  %608 = vmatprep.subr.mxu0 0.0
  %609 = vmatpush2.msra.mxu0 0.0
  %610 = vmatprep.subr.mxu0 0.0
  %611 = vmatpush2.msra.mxu0 0.0
  %612 = vmatprep.subr.mxu0 0.0
  %613 = vmatpush2.msra.mxu0 0.0
  %614 = vmatprep.mubr.f32.mxu0 0.0
  %615 = vmatmul.mubr.f32.gmra.mxu0 %v548
  %v616 = vpop.f32.mrf.mxu0
  %v617 = vadd.f32 0.0, %v616
  %v618 = vpop.f32.mrf.mxu0
  %619 = vdwg.mxu0
  %621 = vrot.lane.b32.xlu0 %v617, 16
  %v622 = vpop.permute.xlu0 %621
  %vm624 = vcmask 254080
  %625 = vst.msk [vmem:[%s8] sm:$0x1] %vm624, %v622
  %s626 = scalar_lea.vmem %s0, 2
  %v627 = vld [vmem:[%s626] sm:$0x1]
  %v628 = vadd.s32 %v627, 16
  %629 = vset.pattern.permute.xlu0 0
  %630 = vperm.xlu0 %629, %v627
  %v631 = vpop.permute.xlu0 %630
  %v632 = vlaneseq
  %v633 = vshrl.u32 %v632, 7
  %v634 = vsub.s32 0, %v633
  %v635 = vrot.slane %v631, %v634
  %vm636 = vcmp.eq.s32.totalorder %v56, %v635
  %637 = vset.pattern.permute.xlu0 1
  %638 = vperm.xlu0 %637, %v628
  %v639 = vpop.permute.xlu0 %638
  %v640 = vlaneseq
  %v641 = vshrl.u32 %v640, 7
  %v642 = vsub.s32 0, %v641
  %v643 = vrot.slane %v639, %v642
  %vm644 = vcmp.eq.s32.totalorder %v56, %v643
  %vm645 = vmor %vm636, %vm644
  %v646 = vsel %vm645, 1, 0
  %v647 = vcvt.s32.f32 %v646
  %v648 = vpack.c.bf16 %v647, %v647
  %v650 = vsel %vm88, %v648, 0
  %652 = vmatprep.subr.bf16.mxu0 0
  %653 = vmatpush1.bf16.msra.mxu0 0
  %654 = vmatprep.subr.bf16.mxu0 0
  %655 = vmatpush1.bf16.msra.mxu0 0
  %656 = vmatprep.subr.bf16.mxu0 0
  %657 = vmatpush1.bf16.msra.mxu0 0
  %658 = vmatprep.subr.bf16.mxu0 0
  %659 = vmatpush1.bf16.msra.mxu0 0
  %660 = vmatprep.subr.bf16.mxu0 0
  %661 = vmatpush1.bf16.msra.mxu0 0
  %662 = vmatprep.subr.bf16.mxu0 0
  %663 = vmatpush1.bf16.msra.mxu0 0
  %664 = vmatprep.subr.bf16.mxu0 0
  %665 = vmatpush1.bf16.msra.mxu0 %v94
  %666 = vmatprep.subr.bf16.mxu0 0
  %667 = vmatpush1.bf16.msra.mxu0 %v85
  %668 = vmatprep.subr.bf16.mxu0 0
  %669 = vmatpush2.bf16.msra.mxu0 0
  %670 = vmatprep.subr.bf16.mxu0 0
  %671 = vmatpush2.bf16.msra.mxu0 0
  %672 = vmatprep.subr.bf16.mxu0 0
  %673 = vmatpush2.bf16.msra.mxu0 0
  %674 = vmatprep.subr.bf16.mxu0 0
  %675 = vmatpush2.bf16.msra.mxu0 0
  %676 = vmatprep.subr.bf16.mxu0 0
  %677 = vmatpush2.bf16.msra.mxu0 0
  %678 = vmatprep.subr.bf16.mxu0 0
  %679 = vmatpush2.bf16.msra.mxu0 0
  %680 = vmatprep.subr.bf16.mxu0 0
  %681 = vmatpush2.bf16.msra.mxu0 0
  %682 = vmatprep.subr.bf16.mxu0 0
  %683 = vmatpush2.bf16.msra.mxu0 0
  %684 = vmatprep.mubr.bf16.mxu0 0
  %685 = vmatmul.mubr.bf16.gmra.mxu0 %v650
  %v686 = vpop.f32.mrf.mxu0
  %v687 = vadd.f32 %v33, %v686
  %v688 = vpop.f32.mrf.mxu0
  %v689 = vpop.f32.mrf.mxu0
  %v690 = vpop.f32.mrf.mxu0
  %691 = vdwg.mxu0
  %v692 = vmax.f32 %v687, 0.0
  %v693 = vpack.c.bf16 %v692, %v692
  %v695 = vsel %vm183, %v693, 0
  %697 = vmatprep.subr.bf16.mxu0 0
  %698 = vmatpush1.bf16.msra.mxu0 %v189
  %699 = vmatprep.subr.bf16.mxu0 0
  %700 = vmatpush1.bf16.msra.mxu0 %v174
  %701 = vmatprep.subr.bf16.mxu0 0
  %702 = vmatpush1.bf16.msra.mxu0 %v173
  %703 = vmatprep.subr.bf16.mxu0 0
  %704 = vmatpush1.bf16.msra.mxu0 %v172
  %705 = vmatprep.subr.bf16.mxu0 0
  %706 = vmatpush1.bf16.msra.mxu0 %v171
  %707 = vmatprep.subr.bf16.mxu0 0
  %708 = vmatpush1.bf16.msra.mxu0 %v170
  %709 = vmatprep.subr.bf16.mxu0 0
  %710 = vmatpush1.bf16.msra.mxu0 %v169
  %711 = vmatprep.subr.bf16.mxu0 0
  %712 = vmatpush1.bf16.msra.mxu0 %v168
  %713 = vmatprep.subr.bf16.mxu0 0
  %714 = vmatpush2.bf16.msra.mxu0 0
  %715 = vmatprep.subr.bf16.mxu0 0
  %716 = vmatpush2.bf16.msra.mxu0 0
  %717 = vmatprep.subr.bf16.mxu0 0
  %718 = vmatpush2.bf16.msra.mxu0 0
  %719 = vmatprep.subr.bf16.mxu0 0
  %720 = vmatpush2.bf16.msra.mxu0 0
  %721 = vmatprep.subr.bf16.mxu0 0
  %722 = vmatpush2.bf16.msra.mxu0 0
  %723 = vmatprep.subr.bf16.mxu0 0
  %724 = vmatpush2.bf16.msra.mxu0 0
  %725 = vmatprep.subr.bf16.mxu0 0
  %726 = vmatpush2.bf16.msra.mxu0 0
  %727 = vmatprep.subr.bf16.mxu0 0
  %728 = vmatpush2.bf16.msra.mxu0 0
  %729 = vmatprep.mubr.bf16.mxu0 0
  %730 = vmatmul.mubr.bf16.gmra.mxu0 %v695
  %v731 = vpop.f32.mrf.mxu0
  %v732 = vadd.f32 %v49, %v731
  %v733 = vpop.f32.mrf.mxu0
  %v734 = vpop.f32.mrf.mxu0
  %v735 = vpop.f32.mrf.mxu0
  %736 = vdwg.mxu0
  %vm737 = vcmp.ge.f32.partialorder %v732, 0.0
  %v738 = vmul.f32 %v732, 0.01
  %v739 = vsel %vm737, %v732, %v738
  %v740 = vpack.c.bf16 %v739, %v739
  %v742 = vsel %vm88, %v740, 0
  %744 = vmatprep.subr.bf16.mxu0 0
  %745 = vmatpush1.bf16.msra.mxu0 0
  %746 = vmatprep.subr.bf16.mxu0 0
  %747 = vmatpush1.bf16.msra.mxu0 0
  %748 = vmatprep.subr.bf16.mxu0 0
  %749 = vmatpush1.bf16.msra.mxu0 0
  %750 = vmatprep.subr.bf16.mxu0 0
  %751 = vmatpush1.bf16.msra.mxu0 0
  %752 = vmatprep.subr.bf16.mxu0 0
  %753 = vmatpush1.bf16.msra.mxu0 0
  %754 = vmatprep.subr.bf16.mxu0 0
  %755 = vmatpush1.bf16.msra.mxu0 0
  %756 = vmatprep.subr.bf16.mxu0 0
  %757 = vmatpush1.bf16.msra.mxu0 %v248
  %758 = vmatprep.subr.bf16.mxu0 0
  %759 = vmatpush1.bf16.msra.mxu0 %v241
  %760 = vmatprep.subr.bf16.mxu0 0
  %761 = vmatpush2.bf16.msra.mxu0 0
  %762 = vmatprep.subr.bf16.mxu0 0
  %763 = vmatpush2.bf16.msra.mxu0 0
  %764 = vmatprep.subr.bf16.mxu0 0
  %765 = vmatpush2.bf16.msra.mxu0 0
  %766 = vmatprep.subr.bf16.mxu0 0
  %767 = vmatpush2.bf16.msra.mxu0 0
  %768 = vmatprep.subr.bf16.mxu0 0
  %769 = vmatpush2.bf16.msra.mxu0 0
  %770 = vmatprep.subr.bf16.mxu0 0
  %771 = vmatpush2.bf16.msra.mxu0 0
  %772 = vmatprep.subr.bf16.mxu0 0
  %773 = vmatpush2.bf16.msra.mxu0 0
  %774 = vmatprep.subr.bf16.mxu0 0
  %775 = vmatpush2.bf16.msra.mxu0 0
  %776 = vmatprep.mubr.bf16.mxu0 0
  %777 = vmatmul.mubr.bf16.gmra.mxu0 %v742
  %v778 = vpop.f32.mrf.mxu0
  %v779 = vadd.f32 %v53, %v778
  %v780 = vpop.f32.mrf.mxu0
  %v781 = vpop.f32.mrf.mxu0
  %v782 = vpop.f32.mrf.mxu0
  %783 = vdwg.mxu0
  %v784 = vsel %vm290, %v779, -inf
  %785 = vmax.xlane.f32.xlu0 %v784
  %v786 = vpop.xlane.xlu0 %785
  %v787 = vsub.f32 %v779, %v786
  %v788 = vmul.f32 %v787, 1.442695
  %v789 = vpow.pop %v788
  %v790 = vsel %vm290, %v789, 0.0
  %791 = vadd.xlane.f32.xlu0 %v790
  %v792 = vpop.xlane.xlu0 %791
  %v793 = vrcp.pop %v792
  %v794 = vmul.f32 %v789, %v793
  %v796 = vsel %vm302, %v794, 0
  %798 = vmatprep.subr.mxu0 0.0
  %799 = vmatpush1.msra.mxu0 0.0
  %800 = vmatprep.subr.mxu0 0.0
  %801 = vmatpush1.msra.mxu0 0.0
  %802 = vmatprep.subr.mxu0 0.0
  %803 = vmatpush1.msra.mxu0 0.0
  %804 = vmatprep.subr.mxu0 0.0
  %805 = vmatpush1.msra.mxu0 0.0
  %806 = vmatprep.subr.mxu0 0.0
  %807 = vmatpush1.msra.mxu0 0.0
  %808 = vmatprep.subr.mxu0 0.0
  %809 = vmatpush1.msra.mxu0 0.0
  %810 = vmatprep.subr.mxu0 0.0
  %811 = vmatpush1.msra.mxu0 0.0
  %812 = vmatprep.subr.mxu0 0.0
  %813 = vmatpush1.msra.mxu0 0.0
  %814 = vmatprep.subr.mxu0 0.0
  %815 = vmatpush1.msra.mxu0 0.0
  %816 = vmatprep.subr.mxu0 0.0
  %817 = vmatpush1.msra.mxu0 0.0
  %818 = vmatprep.subr.mxu0 0.0
  %819 = vmatpush1.msra.mxu0 0.0
  %820 = vmatprep.subr.mxu0 0.0
  %821 = vmatpush1.msra.mxu0 0.0
  %822 = vmatprep.subr.mxu0 0.0
  %823 = vmatpush1.msra.mxu0 0.0
  %824 = vmatprep.subr.mxu0 0.0
  %825 = vmatpush1.msra.mxu0 0.0
  %826 = vmatprep.subr.mxu0 0.0
  %827 = vmatpush1.msra.mxu0 0.0
  %828 = vmatprep.subr.mxu0 0.0
  %829 = vmatpush1.msra.mxu0 %v54
  %830 = vmatprep.subr.mxu0 0.0
  %831 = vmatpush2.msra.mxu0 0.0
  %832 = vmatprep.subr.mxu0 0.0
  %833 = vmatpush2.msra.mxu0 0.0
  %834 = vmatprep.subr.mxu0 0.0
  %835 = vmatpush2.msra.mxu0 0.0
  %836 = vmatprep.subr.mxu0 0.0
  %837 = vmatpush2.msra.mxu0 0.0
  %838 = vmatprep.subr.mxu0 0.0
  %839 = vmatpush2.msra.mxu0 0.0
  %840 = vmatprep.subr.mxu0 0.0
  %841 = vmatpush2.msra.mxu0 0.0
  %842 = vmatprep.subr.mxu0 0.0
  %843 = vmatpush2.msra.mxu0 0.0
  %844 = vmatprep.subr.mxu0 0.0
  %845 = vmatpush2.msra.mxu0 0.0
  %846 = vmatprep.subr.mxu0 0.0
  %847 = vmatpush2.msra.mxu0 0.0
  %848 = vmatprep.subr.mxu0 0.0
  %849 = vmatpush2.msra.mxu0 0.0
  %850 = vmatprep.subr.mxu0 0.0
  %851 = vmatpush2.msra.mxu0 0.0
  %852 = vmatprep.subr.mxu0 0.0
  %853 = vmatpush2.msra.mxu0 0.0
  %854 = vmatprep.subr.mxu0 0.0
  %855 = vmatpush2.msra.mxu0 0.0
  %856 = vmatprep.subr.mxu0 0.0
  %857 = vmatpush2.msra.mxu0 0.0
  %858 = vmatprep.subr.mxu0 0.0
  %859 = vmatpush2.msra.mxu0 0.0
  %860 = vmatprep.subr.mxu0 0.0
  %861 = vmatpush2.msra.mxu0 0.0
  %862 = vmatprep.mubr.f32.mxu0 0.0
  %863 = vmatmul.mubr.f32.gmra.mxu0 %v796
  %v864 = vpop.f32.mrf.mxu0
  %v865 = vadd.f32 0.0, %v864
  %v866 = vpop.f32.mrf.mxu0
  %867 = vdwg.mxu0
  %869 = vrot.lane.b32.xlu0 %v865, 32
  %v870 = vpop.permute.xlu0 %869
  %vm872 = vcmask 385280
  %873 = vst.msk [vmem:[%s8] sm:$0x1] %vm872, %v870
  %s874 = scalar_lea.vmem %s0, 3
  %v875 = vld [vmem:[%s874] sm:$0x1]
  %v876 = vadd.s32 %v875, 16
  %877 = vset.pattern.permute.xlu0 0
  %878 = vperm.xlu0 %877, %v875
  %v879 = vpop.permute.xlu0 %878
  %v880 = vlaneseq
  %v881 = vshrl.u32 %v880, 7
  %v882 = vsub.s32 0, %v881
  %v883 = vrot.slane %v879, %v882
  %vm884 = vcmp.eq.s32.totalorder %v56, %v883
  %885 = vset.pattern.permute.xlu0 1
  %886 = vperm.xlu0 %885, %v876
  %v887 = vpop.permute.xlu0 %886
  %v888 = vlaneseq
  %v889 = vshrl.u32 %v888, 7
  %v890 = vsub.s32 0, %v889
  %v891 = vrot.slane %v887, %v890
  %vm892 = vcmp.eq.s32.totalorder %v56, %v891
  %vm893 = vmor %vm884, %vm892
  %v894 = vsel %vm893, 1, 0
  %v895 = vcvt.s32.f32 %v894
  %v896 = vpack.c.bf16 %v895, %v895
  %v898 = vsel %vm88, %v896, 0
  %900 = vmatprep.subr.bf16.mxu0 0
  %901 = vmatpush1.bf16.msra.mxu0 0
  %902 = vmatprep.subr.bf16.mxu0 0
  %903 = vmatpush1.bf16.msra.mxu0 0
  %904 = vmatprep.subr.bf16.mxu0 0
  %905 = vmatpush1.bf16.msra.mxu0 0
  %906 = vmatprep.subr.bf16.mxu0 0
  %907 = vmatpush1.bf16.msra.mxu0 0
  %908 = vmatprep.subr.bf16.mxu0 0
  %909 = vmatpush1.bf16.msra.mxu0 0
  %910 = vmatprep.subr.bf16.mxu0 0
  %911 = vmatpush1.bf16.msra.mxu0 0
  %912 = vmatprep.subr.bf16.mxu0 0
  %913 = vmatpush1.bf16.msra.mxu0 %v94
  %914 = vmatprep.subr.bf16.mxu0 0
  %915 = vmatpush1.bf16.msra.mxu0 %v85
  %916 = vmatprep.subr.bf16.mxu0 0
  %917 = vmatpush2.bf16.msra.mxu0 0
  %918 = vmatprep.subr.bf16.mxu0 0
  %919 = vmatpush2.bf16.msra.mxu0 0
  %920 = vmatprep.subr.bf16.mxu0 0
  %921 = vmatpush2.bf16.msra.mxu0 0
  %922 = vmatprep.subr.bf16.mxu0 0
  %923 = vmatpush2.bf16.msra.mxu0 0
  %924 = vmatprep.subr.bf16.mxu0 0
  %925 = vmatpush2.bf16.msra.mxu0 0
  %926 = vmatprep.subr.bf16.mxu0 0
  %927 = vmatpush2.bf16.msra.mxu0 0
  %928 = vmatprep.subr.bf16.mxu0 0
  %929 = vmatpush2.bf16.msra.mxu0 0
  %930 = vmatprep.subr.bf16.mxu0 0
  %931 = vmatpush2.bf16.msra.mxu0 0
  %932 = vmatprep.mubr.bf16.mxu0 0
  %933 = vmatmul.mubr.bf16.gmra.mxu0 %v898
  %v934 = vpop.f32.mrf.mxu0
  %v935 = vadd.f32 %v33, %v934
  %v936 = vpop.f32.mrf.mxu0
  %v937 = vpop.f32.mrf.mxu0
  %v938 = vpop.f32.mrf.mxu0
  %939 = vdwg.mxu0
  %v940 = vmax.f32 %v935, 0.0
  %v941 = vpack.c.bf16 %v940, %v940
  %v943 = vsel %vm183, %v941, 0
  %945 = vmatprep.subr.bf16.mxu0 0
  %946 = vmatpush1.bf16.msra.mxu0 %v189
  %947 = vmatprep.subr.bf16.mxu0 0
  %948 = vmatpush1.bf16.msra.mxu0 %v174
  %949 = vmatprep.subr.bf16.mxu0 0
  %950 = vmatpush1.bf16.msra.mxu0 %v173
  %951 = vmatprep.subr.bf16.mxu0 0
  %952 = vmatpush1.bf16.msra.mxu0 %v172
  %953 = vmatprep.subr.bf16.mxu0 0
  %954 = vmatpush1.bf16.msra.mxu0 %v171
  %955 = vmatprep.subr.bf16.mxu0 0
  %956 = vmatpush1.bf16.msra.mxu0 %v170
  %957 = vmatprep.subr.bf16.mxu0 0
  %958 = vmatpush1.bf16.msra.mxu0 %v169
  %959 = vmatprep.subr.bf16.mxu0 0
  %960 = vmatpush1.bf16.msra.mxu0 %v168
  %961 = vmatprep.subr.bf16.mxu0 0
  %962 = vmatpush2.bf16.msra.mxu0 0
  %963 = vmatprep.subr.bf16.mxu0 0
  %964 = vmatpush2.bf16.msra.mxu0 0
  %965 = vmatprep.subr.bf16.mxu0 0
  %966 = vmatpush2.bf16.msra.mxu0 0
  %967 = vmatprep.subr.bf16.mxu0 0
  %968 = vmatpush2.bf16.msra.mxu0 0
  %969 = vmatprep.subr.bf16.mxu0 0
  %970 = vmatpush2.bf16.msra.mxu0 0
  %971 = vmatprep.subr.bf16.mxu0 0
  %972 = vmatpush2.bf16.msra.mxu0 0
  %973 = vmatprep.subr.bf16.mxu0 0
  %974 = vmatpush2.bf16.msra.mxu0 0
  %975 = vmatprep.subr.bf16.mxu0 0
  %976 = vmatpush2.bf16.msra.mxu0 0
  %977 = vmatprep.mubr.bf16.mxu0 0
  %978 = vmatmul.mubr.bf16.gmra.mxu0 %v943
  %v979 = vpop.f32.mrf.mxu0
  %v980 = vadd.f32 %v49, %v979
  %v981 = vpop.f32.mrf.mxu0
  %v982 = vpop.f32.mrf.mxu0
  %v983 = vpop.f32.mrf.mxu0
  %984 = vdwg.mxu0
  %vm985 = vcmp.ge.f32.partialorder %v980, 0.0
  %v986 = vmul.f32 %v980, 0.01
  %v987 = vsel %vm985, %v980, %v986
  %v988 = vpack.c.bf16 %v987, %v987
  %v990 = vsel %vm88, %v988, 0
  %992 = vmatprep.subr.bf16.mxu0 0
  %993 = vmatpush1.bf16.msra.mxu0 0
  %994 = vmatprep.subr.bf16.mxu0 0
  %995 = vmatpush1.bf16.msra.mxu0 0
  %996 = vmatprep.subr.bf16.mxu0 0
  %997 = vmatpush1.bf16.msra.mxu0 0
  %998 = vmatprep.subr.bf16.mxu0 0
  %999 = vmatpush1.bf16.msra.mxu0 0
  %1000 = vmatprep.subr.bf16.mxu0 0
  %1001 = vmatpush1.bf16.msra.mxu0 0
  %1002 = vmatprep.subr.bf16.mxu0 0
  %1003 = vmatpush1.bf16.msra.mxu0 0
  %1004 = vmatprep.subr.bf16.mxu0 0
  %1005 = vmatpush1.bf16.msra.mxu0 %v248
  %1006 = vmatprep.subr.bf16.mxu0 0
  %1007 = vmatpush1.bf16.msra.mxu0 %v241
  %1008 = vmatprep.subr.bf16.mxu0 0
  %1009 = vmatpush2.bf16.msra.mxu0 0
  %1010 = vmatprep.subr.bf16.mxu0 0
  %1011 = vmatpush2.bf16.msra.mxu0 0
  %1012 = vmatprep.subr.bf16.mxu0 0
  %1013 = vmatpush2.bf16.msra.mxu0 0
  %1014 = vmatprep.subr.bf16.mxu0 0
  %1015 = vmatpush2.bf16.msra.mxu0 0
  %1016 = vmatprep.subr.bf16.mxu0 0
  %1017 = vmatpush2.bf16.msra.mxu0 0
  %1018 = vmatprep.subr.bf16.mxu0 0
  %1019 = vmatpush2.bf16.msra.mxu0 0
  %1020 = vmatprep.subr.bf16.mxu0 0
  %1021 = vmatpush2.bf16.msra.mxu0 0
  %1022 = vmatprep.subr.bf16.mxu0 0
  %1023 = vmatpush2.bf16.msra.mxu0 0
  %1024 = vmatprep.mubr.bf16.mxu0 0
  %1025 = vmatmul.mubr.bf16.gmra.mxu0 %v990
  %v1026 = vpop.f32.mrf.mxu0
  %v1027 = vadd.f32 %v53, %v1026
  %v1028 = vpop.f32.mrf.mxu0
  %v1029 = vpop.f32.mrf.mxu0
  %v1030 = vpop.f32.mrf.mxu0
  %1031 = vdwg.mxu0
  %v1032 = vsel %vm290, %v1027, -inf
  %1033 = vmax.xlane.f32.xlu0 %v1032
  %v1034 = vpop.xlane.xlu0 %1033
  %v1035 = vsub.f32 %v1027, %v1034
  %v1036 = vmul.f32 %v1035, 1.442695
  %v1037 = vpow.pop %v1036
  %v1038 = vsel %vm290, %v1037, 0.0
  %1039 = vadd.xlane.f32.xlu0 %v1038
  %v1040 = vpop.xlane.xlu0 %1039
  %v1041 = vrcp.pop %v1040
  %v1042 = vmul.f32 %v1037, %v1041
  %v1044 = vsel %vm302, %v1042, 0
  %1046 = vmatprep.subr.mxu0 0.0
  %1047 = vmatpush1.msra.mxu0 0.0
  %1048 = vmatprep.subr.mxu0 0.0
  %1049 = vmatpush1.msra.mxu0 0.0
  %1050 = vmatprep.subr.mxu0 0.0
  %1051 = vmatpush1.msra.mxu0 0.0
  %1052 = vmatprep.subr.mxu0 0.0
  %1053 = vmatpush1.msra.mxu0 0.0
  %1054 = vmatprep.subr.mxu0 0.0
  %1055 = vmatpush1.msra.mxu0 0.0
  %1056 = vmatprep.subr.mxu0 0.0
  %1057 = vmatpush1.msra.mxu0 0.0
  %1058 = vmatprep.subr.mxu0 0.0
  %1059 = vmatpush1.msra.mxu0 0.0
  %1060 = vmatprep.subr.mxu0 0.0
  %1061 = vmatpush1.msra.mxu0 0.0
  %1062 = vmatprep.subr.mxu0 0.0
  %1063 = vmatpush1.msra.mxu0 0.0
  %1064 = vmatprep.subr.mxu0 0.0
  %1065 = vmatpush1.msra.mxu0 0.0
  %1066 = vmatprep.subr.mxu0 0.0
  %1067 = vmatpush1.msra.mxu0 0.0
  %1068 = vmatprep.subr.mxu0 0.0
  %1069 = vmatpush1.msra.mxu0 0.0
  %1070 = vmatprep.subr.mxu0 0.0
  %1071 = vmatpush1.msra.mxu0 0.0
  %1072 = vmatprep.subr.mxu0 0.0
  %1073 = vmatpush1.msra.mxu0 0.0
  %1074 = vmatprep.subr.mxu0 0.0
  %1075 = vmatpush1.msra.mxu0 0.0
  %1076 = vmatprep.subr.mxu0 0.0
  %1077 = vmatpush1.msra.mxu0 %v54
  %1078 = vmatprep.subr.mxu0 0.0
  %1079 = vmatpush2.msra.mxu0 0.0
  %1080 = vmatprep.subr.mxu0 0.0
  %1081 = vmatpush2.msra.mxu0 0.0
  %1082 = vmatprep.subr.mxu0 0.0
  %1083 = vmatpush2.msra.mxu0 0.0
  %1084 = vmatprep.subr.mxu0 0.0
  %1085 = vmatpush2.msra.mxu0 0.0
  %1086 = vmatprep.subr.mxu0 0.0
  %1087 = vmatpush2.msra.mxu0 0.0
  %1088 = vmatprep.subr.mxu0 0.0
  %1089 = vmatpush2.msra.mxu0 0.0
  %1090 = vmatprep.subr.mxu0 0.0
  %1091 = vmatpush2.msra.mxu0 0.0
  %1092 = vmatprep.subr.mxu0 0.0
  %1093 = vmatpush2.msra.mxu0 0.0
  %1094 = vmatprep.subr.mxu0 0.0
  %1095 = vmatpush2.msra.mxu0 0.0
  %1096 = vmatprep.subr.mxu0 0.0
  %1097 = vmatpush2.msra.mxu0 0.0
  %1098 = vmatprep.subr.mxu0 0.0
  %1099 = vmatpush2.msra.mxu0 0.0
  %1100 = vmatprep.subr.mxu0 0.0
  %1101 = vmatpush2.msra.mxu0 0.0
  %1102 = vmatprep.subr.mxu0 0.0
  %1103 = vmatpush2.msra.mxu0 0.0
  %1104 = vmatprep.subr.mxu0 0.0
  %1105 = vmatpush2.msra.mxu0 0.0
  %1106 = vmatprep.subr.mxu0 0.0
  %1107 = vmatpush2.msra.mxu0 0.0
  %1108 = vmatprep.subr.mxu0 0.0
  %1109 = vmatpush2.msra.mxu0 0.0
  %1110 = vmatprep.mubr.f32.mxu0 0.0
  %1111 = vmatmul.mubr.f32.gmra.mxu0 %v1044
  %v1112 = vpop.f32.mrf.mxu0
  %v1113 = vadd.f32 0.0, %v1112
  %v1114 = vpop.f32.mrf.mxu0
  %1115 = vdwg.mxu0
  %1117 = vrot.lane.b32.xlu0 %v1113, 48
  %v1118 = vpop.permute.xlu0 %1117
  %vm1120 = vcmask 516480
  %1121 = vst.msk [vmem:[%s8] sm:$0x1] %vm1120, %v1118
  %s1122 = scalar_lea.vmem %s0, 4
  %v1123 = vld [vmem:[%s1122] sm:$0x1]
  %v1124 = vadd.s32 %v1123, 16
  %1125 = vset.pattern.permute.xlu0 0
  %1126 = vperm.xlu0 %1125, %v1123
  %v1127 = vpop.permute.xlu0 %1126
  %v1128 = vlaneseq
  %v1129 = vshrl.u32 %v1128, 7
  %v1130 = vsub.s32 0, %v1129
  %v1131 = vrot.slane %v1127, %v1130
  %vm1132 = vcmp.eq.s32.totalorder %v56, %v1131
  %1133 = vset.pattern.permute.xlu0 1
  %1134 = vperm.xlu0 %1133, %v1124
  %v1135 = vpop.permute.xlu0 %1134
  %v1136 = vlaneseq
  %v1137 = vshrl.u32 %v1136, 7
  %v1138 = vsub.s32 0, %v1137
  %v1139 = vrot.slane %v1135, %v1138
  %vm1140 = vcmp.eq.s32.totalorder %v56, %v1139
  %vm1141 = vmor %vm1132, %vm1140
  %v1142 = vsel %vm1141, 1, 0
  %v1143 = vcvt.s32.f32 %v1142
  %v1144 = vpack.c.bf16 %v1143, %v1143
  %v1146 = vsel %vm88, %v1144, 0
  %1148 = vmatprep.subr.bf16.mxu0 0
  %1149 = vmatpush1.bf16.msra.mxu0 0
  %1150 = vmatprep.subr.bf16.mxu0 0
  %1151 = vmatpush1.bf16.msra.mxu0 0
  %1152 = vmatprep.subr.bf16.mxu0 0
  %1153 = vmatpush1.bf16.msra.mxu0 0
  %1154 = vmatprep.subr.bf16.mxu0 0
  %1155 = vmatpush1.bf16.msra.mxu0 0
  %1156 = vmatprep.subr.bf16.mxu0 0
  %1157 = vmatpush1.bf16.msra.mxu0 0
  %1158 = vmatprep.subr.bf16.mxu0 0
  %1159 = vmatpush1.bf16.msra.mxu0 0
  %1160 = vmatprep.subr.bf16.mxu0 0
  %1161 = vmatpush1.bf16.msra.mxu0 %v94
  %1162 = vmatprep.subr.bf16.mxu0 0
  %1163 = vmatpush1.bf16.msra.mxu0 %v85
  %1164 = vmatprep.subr.bf16.mxu0 0
  %1165 = vmatpush2.bf16.msra.mxu0 0
  %1166 = vmatprep.subr.bf16.mxu0 0
  %1167 = vmatpush2.bf16.msra.mxu0 0
  %1168 = vmatprep.subr.bf16.mxu0 0
  %1169 = vmatpush2.bf16.msra.mxu0 0
  %1170 = vmatprep.subr.bf16.mxu0 0
  %1171 = vmatpush2.bf16.msra.mxu0 0
  %1172 = vmatprep.subr.bf16.mxu0 0
  %1173 = vmatpush2.bf16.msra.mxu0 0
  %1174 = vmatprep.subr.bf16.mxu0 0
  %1175 = vmatpush2.bf16.msra.mxu0 0
  %1176 = vmatprep.subr.bf16.mxu0 0
  %1177 = vmatpush2.bf16.msra.mxu0 0
  %1178 = vmatprep.subr.bf16.mxu0 0
  %1179 = vmatpush2.bf16.msra.mxu0 0
  %1180 = vmatprep.mubr.bf16.mxu0 0
  %1181 = vmatmul.mubr.bf16.gmra.mxu0 %v1146
  %v1182 = vpop.f32.mrf.mxu0
  %v1183 = vadd.f32 %v33, %v1182
  %v1184 = vpop.f32.mrf.mxu0
  %v1185 = vpop.f32.mrf.mxu0
  %v1186 = vpop.f32.mrf.mxu0
  %1187 = vdwg.mxu0
  %v1188 = vmax.f32 %v1183, 0.0
  %v1189 = vpack.c.bf16 %v1188, %v1188
  %v1191 = vsel %vm183, %v1189, 0
  %1193 = vmatprep.subr.bf16.mxu0 0
  %1194 = vmatpush1.bf16.msra.mxu0 %v189
  %1195 = vmatprep.subr.bf16.mxu0 0
  %1196 = vmatpush1.bf16.msra.mxu0 %v174
  %1197 = vmatprep.subr.bf16.mxu0 0
  %1198 = vmatpush1.bf16.msra.mxu0 %v173
  %1199 = vmatprep.subr.bf16.mxu0 0
  %1200 = vmatpush1.bf16.msra.mxu0 %v172
  %1201 = vmatprep.subr.bf16.mxu0 0
  %1202 = vmatpush1.bf16.msra.mxu0 %v171
  %1203 = vmatprep.subr.bf16.mxu0 0
  %1204 = vmatpush1.bf16.msra.mxu0 %v170
  %1205 = vmatprep.subr.bf16.mxu0 0
  %1206 = vmatpush1.bf16.msra.mxu0 %v169
  %1207 = vmatprep.subr.bf16.mxu0 0
  %1208 = vmatpush1.bf16.msra.mxu0 %v168
  %1209 = vmatprep.subr.bf16.mxu0 0
  %1210 = vmatpush2.bf16.msra.mxu0 0
  %1211 = vmatprep.subr.bf16.mxu0 0
  %1212 = vmatpush2.bf16.msra.mxu0 0
  %1213 = vmatprep.subr.bf16.mxu0 0
  %1214 = vmatpush2.bf16.msra.mxu0 0
  %1215 = vmatprep.subr.bf16.mxu0 0
  %1216 = vmatpush2.bf16.msra.mxu0 0
  %1217 = vmatprep.subr.bf16.mxu0 0
  %1218 = vmatpush2.bf16.msra.mxu0 0
  %1219 = vmatprep.subr.bf16.mxu0 0
  %1220 = vmatpush2.bf16.msra.mxu0 0
  %1221 = vmatprep.subr.bf16.mxu0 0
  %1222 = vmatpush2.bf16.msra.mxu0 0
  %1223 = vmatprep.subr.bf16.mxu0 0
  %1224 = vmatpush2.bf16.msra.mxu0 0
  %1225 = vmatprep.mubr.bf16.mxu0 0
  %1226 = vmatmul.mubr.bf16.gmra.mxu0 %v1191
  %v1227 = vpop.f32.mrf.mxu0
  %v1228 = vadd.f32 %v49, %v1227
  %v1229 = vpop.f32.mrf.mxu0
  %v1230 = vpop.f32.mrf.mxu0
  %v1231 = vpop.f32.mrf.mxu0
  %1232 = vdwg.mxu0
  %vm1233 = vcmp.ge.f32.partialorder %v1228, 0.0
  %v1234 = vmul.f32 %v1228, 0.01
  %v1235 = vsel %vm1233, %v1228, %v1234
  %v1236 = vpack.c.bf16 %v1235, %v1235
  %v1238 = vsel %vm88, %v1236, 0
  %1240 = vmatprep.subr.bf16.mxu0 0
  %1241 = vmatpush1.bf16.msra.mxu0 0
  %1242 = vmatprep.subr.bf16.mxu0 0
  %1243 = vmatpush1.bf16.msra.mxu0 0
  %1244 = vmatprep.subr.bf16.mxu0 0
  %1245 = vmatpush1.bf16.msra.mxu0 0
  %1246 = vmatprep.subr.bf16.mxu0 0
  %1247 = vmatpush1.bf16.msra.mxu0 0
  %1248 = vmatprep.subr.bf16.mxu0 0
  %1249 = vmatpush1.bf16.msra.mxu0 0
  %1250 = vmatprep.subr.bf16.mxu0 0
  %1251 = vmatpush1.bf16.msra.mxu0 0
  %1252 = vmatprep.subr.bf16.mxu0 0
  %1253 = vmatpush1.bf16.msra.mxu0 %v248
  %1254 = vmatprep.subr.bf16.mxu0 0
  %1255 = vmatpush1.bf16.msra.mxu0 %v241
  %1256 = vmatprep.subr.bf16.mxu0 0
  %1257 = vmatpush2.bf16.msra.mxu0 0
  %1258 = vmatprep.subr.bf16.mxu0 0
  %1259 = vmatpush2.bf16.msra.mxu0 0
  %1260 = vmatprep.subr.bf16.mxu0 0
  %1261 = vmatpush2.bf16.msra.mxu0 0
  %1262 = vmatprep.subr.bf16.mxu0 0
  %1263 = vmatpush2.bf16.msra.mxu0 0
  %1264 = vmatprep.subr.bf16.mxu0 0
  %1265 = vmatpush2.bf16.msra.mxu0 0
  %1266 = vmatprep.subr.bf16.mxu0 0
  %1267 = vmatpush2.bf16.msra.mxu0 0
  %1268 = vmatprep.subr.bf16.mxu0 0
  %1269 = vmatpush2.bf16.msra.mxu0 0
  %1270 = vmatprep.subr.bf16.mxu0 0
  %1271 = vmatpush2.bf16.msra.mxu0 0
  %1272 = vmatprep.mubr.bf16.mxu0 0
  %1273 = vmatmul.mubr.bf16.gmra.mxu0 %v1238
  %v1274 = vpop.f32.mrf.mxu0
  %v1275 = vadd.f32 %v53, %v1274
  %v1276 = vpop.f32.mrf.mxu0
  %v1277 = vpop.f32.mrf.mxu0
  %v1278 = vpop.f32.mrf.mxu0
  %1279 = vdwg.mxu0
  %v1280 = vsel %vm290, %v1275, -inf
  %1281 = vmax.xlane.f32.xlu0 %v1280
  %v1282 = vpop.xlane.xlu0 %1281
  %v1283 = vsub.f32 %v1275, %v1282
  %v1284 = vmul.f32 %v1283, 1.442695
  %v1285 = vpow.pop %v1284
  %v1286 = vsel %vm290, %v1285, 0.0
  %1287 = vadd.xlane.f32.xlu0 %v1286
  %v1288 = vpop.xlane.xlu0 %1287
  %v1289 = vrcp.pop %v1288
  %v1290 = vmul.f32 %v1285, %v1289
  %v1292 = vsel %vm302, %v1290, 0
  %1294 = vmatprep.subr.mxu0 0.0
  %1295 = vmatpush1.msra.mxu0 0.0
  %1296 = vmatprep.subr.mxu0 0.0
  %1297 = vmatpush1.msra.mxu0 0.0
  %1298 = vmatprep.subr.mxu0 0.0
  %1299 = vmatpush1.msra.mxu0 0.0
  %1300 = vmatprep.subr.mxu0 0.0
  %1301 = vmatpush1.msra.mxu0 0.0
  %1302 = vmatprep.subr.mxu0 0.0
  %1303 = vmatpush1.msra.mxu0 0.0
  %1304 = vmatprep.subr.mxu0 0.0
  %1305 = vmatpush1.msra.mxu0 0.0
  %1306 = vmatprep.subr.mxu0 0.0
  %1307 = vmatpush1.msra.mxu0 0.0
  %1308 = vmatprep.subr.mxu0 0.0
  %1309 = vmatpush1.msra.mxu0 0.0
  %1310 = vmatprep.subr.mxu0 0.0
  %1311 = vmatpush1.msra.mxu0 0.0
  %1312 = vmatprep.subr.mxu0 0.0
  %1313 = vmatpush1.msra.mxu0 0.0
  %1314 = vmatprep.subr.mxu0 0.0
  %1315 = vmatpush1.msra.mxu0 0.0
  %1316 = vmatprep.subr.mxu0 0.0
  %1317 = vmatpush1.msra.mxu0 0.0
  %1318 = vmatprep.subr.mxu0 0.0
  %1319 = vmatpush1.msra.mxu0 0.0
  %1320 = vmatprep.subr.mxu0 0.0
  %1321 = vmatpush1.msra.mxu0 0.0
  %1322 = vmatprep.subr.mxu0 0.0
  %1323 = vmatpush1.msra.mxu0 0.0
  %1324 = vmatprep.subr.mxu0 0.0
  %1325 = vmatpush1.msra.mxu0 %v54
  %1326 = vmatprep.subr.mxu0 0.0
  %1327 = vmatpush2.msra.mxu0 0.0
  %1328 = vmatprep.subr.mxu0 0.0
  %1329 = vmatpush2.msra.mxu0 0.0
  %1330 = vmatprep.subr.mxu0 0.0
  %1331 = vmatpush2.msra.mxu0 0.0
  %1332 = vmatprep.subr.mxu0 0.0
  %1333 = vmatpush2.msra.mxu0 0.0
  %1334 = vmatprep.subr.mxu0 0.0
  %1335 = vmatpush2.msra.mxu0 0.0
  %1336 = vmatprep.subr.mxu0 0.0
  %1337 = vmatpush2.msra.mxu0 0.0
  %1338 = vmatprep.subr.mxu0 0.0
  %1339 = vmatpush2.msra.mxu0 0.0
  %1340 = vmatprep.subr.mxu0 0.0
  %1341 = vmatpush2.msra.mxu0 0.0
  %1342 = vmatprep.subr.mxu0 0.0
  %1343 = vmatpush2.msra.mxu0 0.0
  %1344 = vmatprep.subr.mxu0 0.0
  %1345 = vmatpush2.msra.mxu0 0.0
  %1346 = vmatprep.subr.mxu0 0.0
  %1347 = vmatpush2.msra.mxu0 0.0
  %1348 = vmatprep.subr.mxu0 0.0
  %1349 = vmatpush2.msra.mxu0 0.0
  %1350 = vmatprep.subr.mxu0 0.0
  %1351 = vmatpush2.msra.mxu0 0.0
  %1352 = vmatprep.subr.mxu0 0.0
  %1353 = vmatpush2.msra.mxu0 0.0
  %1354 = vmatprep.subr.mxu0 0.0
  %1355 = vmatpush2.msra.mxu0 0.0
  %1356 = vmatprep.subr.mxu0 0.0
  %1357 = vmatpush2.msra.mxu0 0.0
  %1358 = vmatprep.mubr.f32.mxu0 0.0
  %1359 = vmatmul.mubr.f32.gmra.mxu0 %v1292
  %v1360 = vpop.f32.mrf.mxu0
  %v1361 = vadd.f32 0.0, %v1360
  %v1362 = vpop.f32.mrf.mxu0
  %1363 = vdwg.mxu0
  %1365 = vrot.lane.b32.xlu0 %v1361, 64
  %v1366 = vpop.permute.xlu0 %1365
  %vm1368 = vcmask 647680
  %1369 = vst.msk [vmem:[%s8] sm:$0x1] %vm1368, %v1366
  %s1370 = scalar_lea.vmem %s0, 5
  %v1371 = vld [vmem:[%s1370] sm:$0x1]
  %v1372 = vadd.s32 %v1371, 16
  %1373 = vset.pattern.permute.xlu0 0
  %1374 = vperm.xlu0 %1373, %v1371
  %v1375 = vpop.permute.xlu0 %1374
  %v1376 = vlaneseq
  %v1377 = vshrl.u32 %v1376, 7
  %v1378 = vsub.s32 0, %v1377
  %v1379 = vrot.slane %v1375, %v1378
  %vm1380 = vcmp.eq.s32.totalorder %v56, %v1379
  %1381 = vset.pattern.permute.xlu0 1
  %1382 = vperm.xlu0 %1381, %v1372
  %v1383 = vpop.permute.xlu0 %1382
  %v1384 = vlaneseq
  %v1385 = vshrl.u32 %v1384, 7
  %v1386 = vsub.s32 0, %v1385
  %v1387 = vrot.slane %v1383, %v1386
  %vm1388 = vcmp.eq.s32.totalorder %v56, %v1387
  %vm1389 = vmor %vm1380, %vm1388
  %v1390 = vsel %vm1389, 1, 0
  %v1391 = vcvt.s32.f32 %v1390
  %v1392 = vpack.c.bf16 %v1391, %v1391
  %v1394 = vsel %vm88, %v1392, 0
  %1396 = vmatprep.subr.bf16.mxu0 0
  %1397 = vmatpush1.bf16.msra.mxu0 0
  %1398 = vmatprep.subr.bf16.mxu0 0
  %1399 = vmatpush1.bf16.msra.mxu0 0
  %1400 = vmatprep.subr.bf16.mxu0 0
  %1401 = vmatpush1.bf16.msra.mxu0 0
  %1402 = vmatprep.subr.bf16.mxu0 0
  %1403 = vmatpush1.bf16.msra.mxu0 0
  %1404 = vmatprep.subr.bf16.mxu0 0
  %1405 = vmatpush1.bf16.msra.mxu0 0
  %1406 = vmatprep.subr.bf16.mxu0 0
  %1407 = vmatpush1.bf16.msra.mxu0 0
  %1408 = vmatprep.subr.bf16.mxu0 0
  %1409 = vmatpush1.bf16.msra.mxu0 %v94
  %1410 = vmatprep.subr.bf16.mxu0 0
  %1411 = vmatpush1.bf16.msra.mxu0 %v85
  %1412 = vmatprep.subr.bf16.mxu0 0
  %1413 = vmatpush2.bf16.msra.mxu0 0
  %1414 = vmatprep.subr.bf16.mxu0 0
  %1415 = vmatpush2.bf16.msra.mxu0 0
  %1416 = vmatprep.subr.bf16.mxu0 0
  %1417 = vmatpush2.bf16.msra.mxu0 0
  %1418 = vmatprep.subr.bf16.mxu0 0
  %1419 = vmatpush2.bf16.msra.mxu0 0
  %1420 = vmatprep.subr.bf16.mxu0 0
  %1421 = vmatpush2.bf16.msra.mxu0 0
  %1422 = vmatprep.subr.bf16.mxu0 0
  %1423 = vmatpush2.bf16.msra.mxu0 0
  %1424 = vmatprep.subr.bf16.mxu0 0
  %1425 = vmatpush2.bf16.msra.mxu0 0
  %1426 = vmatprep.subr.bf16.mxu0 0
  %1427 = vmatpush2.bf16.msra.mxu0 0
  %1428 = vmatprep.mubr.bf16.mxu0 0
  %1429 = vmatmul.mubr.bf16.gmra.mxu0 %v1394
  %v1430 = vpop.f32.mrf.mxu0
  %v1431 = vadd.f32 %v33, %v1430
  %v1432 = vpop.f32.mrf.mxu0
  %v1433 = vpop.f32.mrf.mxu0
  %v1434 = vpop.f32.mrf.mxu0
  %1435 = vdwg.mxu0
  %v1436 = vmax.f32 %v1431, 0.0
  %v1437 = vpack.c.bf16 %v1436, %v1436
  %v1439 = vsel %vm183, %v1437, 0
  %1441 = vmatprep.subr.bf16.mxu0 0
  %1442 = vmatpush1.bf16.msra.mxu0 %v189
  %1443 = vmatprep.subr.bf16.mxu0 0
  %1444 = vmatpush1.bf16.msra.mxu0 %v174
  %1445 = vmatprep.subr.bf16.mxu0 0
  %1446 = vmatpush1.bf16.msra.mxu0 %v173
  %1447 = vmatprep.subr.bf16.mxu0 0
  %1448 = vmatpush1.bf16.msra.mxu0 %v172
  %1449 = vmatprep.subr.bf16.mxu0 0
  %1450 = vmatpush1.bf16.msra.mxu0 %v171
  %1451 = vmatprep.subr.bf16.mxu0 0
  %1452 = vmatpush1.bf16.msra.mxu0 %v170
  %1453 = vmatprep.subr.bf16.mxu0 0
  %1454 = vmatpush1.bf16.msra.mxu0 %v169
  %1455 = vmatprep.subr.bf16.mxu0 0
  %1456 = vmatpush1.bf16.msra.mxu0 %v168
  %1457 = vmatprep.subr.bf16.mxu0 0
  %1458 = vmatpush2.bf16.msra.mxu0 0
  %1459 = vmatprep.subr.bf16.mxu0 0
  %1460 = vmatpush2.bf16.msra.mxu0 0
  %1461 = vmatprep.subr.bf16.mxu0 0
  %1462 = vmatpush2.bf16.msra.mxu0 0
  %1463 = vmatprep.subr.bf16.mxu0 0
  %1464 = vmatpush2.bf16.msra.mxu0 0
  %1465 = vmatprep.subr.bf16.mxu0 0
  %1466 = vmatpush2.bf16.msra.mxu0 0
  %1467 = vmatprep.subr.bf16.mxu0 0
  %1468 = vmatpush2.bf16.msra.mxu0 0
  %1469 = vmatprep.subr.bf16.mxu0 0
  %1470 = vmatpush2.bf16.msra.mxu0 0
  %1471 = vmatprep.subr.bf16.mxu0 0
  %1472 = vmatpush2.bf16.msra.mxu0 0
  %1473 = vmatprep.mubr.bf16.mxu0 0
  %1474 = vmatmul.mubr.bf16.gmra.mxu0 %v1439
  %v1475 = vpop.f32.mrf.mxu0
  %v1476 = vadd.f32 %v49, %v1475
  %v1477 = vpop.f32.mrf.mxu0
  %v1478 = vpop.f32.mrf.mxu0
  %v1479 = vpop.f32.mrf.mxu0
  %1480 = vdwg.mxu0
  %vm1481 = vcmp.ge.f32.partialorder %v1476, 0.0
  %v1482 = vmul.f32 %v1476, 0.01
  %v1483 = vsel %vm1481, %v1476, %v1482
  %v1484 = vpack.c.bf16 %v1483, %v1483
  %v1486 = vsel %vm88, %v1484, 0
  %1488 = vmatprep.subr.bf16.mxu0 0
  %1489 = vmatpush1.bf16.msra.mxu0 0
  %1490 = vmatprep.subr.bf16.mxu0 0
  %1491 = vmatpush1.bf16.msra.mxu0 0
  %1492 = vmatprep.subr.bf16.mxu0 0
  %1493 = vmatpush1.bf16.msra.mxu0 0
  %1494 = vmatprep.subr.bf16.mxu0 0
  %1495 = vmatpush1.bf16.msra.mxu0 0
  %1496 = vmatprep.subr.bf16.mxu0 0
  %1497 = vmatpush1.bf16.msra.mxu0 0
  %1498 = vmatprep.subr.bf16.mxu0 0
  %1499 = vmatpush1.bf16.msra.mxu0 0
  %1500 = vmatprep.subr.bf16.mxu0 0
  %1501 = vmatpush1.bf16.msra.mxu0 %v248
  %1502 = vmatprep.subr.bf16.mxu0 0
  %1503 = vmatpush1.bf16.msra.mxu0 %v241
  %1504 = vmatprep.subr.bf16.mxu0 0
  %1505 = vmatpush2.bf16.msra.mxu0 0
  %1506 = vmatprep.subr.bf16.mxu0 0
  %1507 = vmatpush2.bf16.msra.mxu0 0
  %1508 = vmatprep.subr.bf16.mxu0 0
  %1509 = vmatpush2.bf16.msra.mxu0 0
  %1510 = vmatprep.subr.bf16.mxu0 0
  %1511 = vmatpush2.bf16.msra.mxu0 0
  %1512 = vmatprep.subr.bf16.mxu0 0
  %1513 = vmatpush2.bf16.msra.mxu0 0
  %1514 = vmatprep.subr.bf16.mxu0 0
  %1515 = vmatpush2.bf16.msra.mxu0 0
  %1516 = vmatprep.subr.bf16.mxu0 0
  %1517 = vmatpush2.bf16.msra.mxu0 0
  %1518 = vmatprep.subr.bf16.mxu0 0
  %1519 = vmatpush2.bf16.msra.mxu0 0
  %1520 = vmatprep.mubr.bf16.mxu0 0
  %1521 = vmatmul.mubr.bf16.gmra.mxu0 %v1486
  %v1522 = vpop.f32.mrf.mxu0
  %v1523 = vadd.f32 %v53, %v1522
  %v1524 = vpop.f32.mrf.mxu0
  %v1525 = vpop.f32.mrf.mxu0
  %v1526 = vpop.f32.mrf.mxu0
  %1527 = vdwg.mxu0
  %v1528 = vsel %vm290, %v1523, -inf
  %1529 = vmax.xlane.f32.xlu0 %v1528
  %v1530 = vpop.xlane.xlu0 %1529
  %v1531 = vsub.f32 %v1523, %v1530
  %v1532 = vmul.f32 %v1531, 1.442695
  %v1533 = vpow.pop %v1532
  %v1534 = vsel %vm290, %v1533, 0.0
  %1535 = vadd.xlane.f32.xlu0 %v1534
  %v1536 = vpop.xlane.xlu0 %1535
  %v1537 = vrcp.pop %v1536
  %v1538 = vmul.f32 %v1533, %v1537
  %v1540 = vsel %vm302, %v1538, 0
  %1542 = vmatprep.subr.mxu0 0.0
  %1543 = vmatpush1.msra.mxu0 0.0
  %1544 = vmatprep.subr.mxu0 0.0
  %1545 = vmatpush1.msra.mxu0 0.0
  %1546 = vmatprep.subr.mxu0 0.0
  %1547 = vmatpush1.msra.mxu0 0.0
  %1548 = vmatprep.subr.mxu0 0.0
  %1549 = vmatpush1.msra.mxu0 0.0
  %1550 = vmatprep.subr.mxu0 0.0
  %1551 = vmatpush1.msra.mxu0 0.0
  %1552 = vmatprep.subr.mxu0 0.0
  %1553 = vmatpush1.msra.mxu0 0.0
  %1554 = vmatprep.subr.mxu0 0.0
  %1555 = vmatpush1.msra.mxu0 0.0
  %1556 = vmatprep.subr.mxu0 0.0
  %1557 = vmatpush1.msra.mxu0 0.0
  %1558 = vmatprep.subr.mxu0 0.0
  %1559 = vmatpush1.msra.mxu0 0.0
  %1560 = vmatprep.subr.mxu0 0.0
  %1561 = vmatpush1.msra.mxu0 0.0
  %1562 = vmatprep.subr.mxu0 0.0
  %1563 = vmatpush1.msra.mxu0 0.0
  %1564 = vmatprep.subr.mxu0 0.0
  %1565 = vmatpush1.msra.mxu0 0.0
  %1566 = vmatprep.subr.mxu0 0.0
  %1567 = vmatpush1.msra.mxu0 0.0
  %1568 = vmatprep.subr.mxu0 0.0
  %1569 = vmatpush1.msra.mxu0 0.0
  %1570 = vmatprep.subr.mxu0 0.0
  %1571 = vmatpush1.msra.mxu0 0.0
  %1572 = vmatprep.subr.mxu0 0.0
  %1573 = vmatpush1.msra.mxu0 %v54
  %1574 = vmatprep.subr.mxu0 0.0
  %1575 = vmatpush2.msra.mxu0 0.0
  %1576 = vmatprep.subr.mxu0 0.0
  %1577 = vmatpush2.msra.mxu0 0.0
  %1578 = vmatprep.subr.mxu0 0.0
  %1579 = vmatpush2.msra.mxu0 0.0
  %1580 = vmatprep.subr.mxu0 0.0
  %1581 = vmatpush2.msra.mxu0 0.0
  %1582 = vmatprep.subr.mxu0 0.0
  %1583 = vmatpush2.msra.mxu0 0.0
  %1584 = vmatprep.subr.mxu0 0.0
  %1585 = vmatpush2.msra.mxu0 0.0
  %1586 = vmatprep.subr.mxu0 0.0
  %1587 = vmatpush2.msra.mxu0 0.0
  %1588 = vmatprep.subr.mxu0 0.0
  %1589 = vmatpush2.msra.mxu0 0.0
  %1590 = vmatprep.subr.mxu0 0.0
  %1591 = vmatpush2.msra.mxu0 0.0
  %1592 = vmatprep.subr.mxu0 0.0
  %1593 = vmatpush2.msra.mxu0 0.0
  %1594 = vmatprep.subr.mxu0 0.0
  %1595 = vmatpush2.msra.mxu0 0.0
  %1596 = vmatprep.subr.mxu0 0.0
  %1597 = vmatpush2.msra.mxu0 0.0
  %1598 = vmatprep.subr.mxu0 0.0
  %1599 = vmatpush2.msra.mxu0 0.0
  %1600 = vmatprep.subr.mxu0 0.0
  %1601 = vmatpush2.msra.mxu0 0.0
  %1602 = vmatprep.subr.mxu0 0.0
  %1603 = vmatpush2.msra.mxu0 0.0
  %1604 = vmatprep.subr.mxu0 0.0
  %1605 = vmatpush2.msra.mxu0 0.0
  %1606 = vmatprep.mubr.f32.mxu0 0.0
  %1607 = vmatmul.mubr.f32.gmra.mxu0 %v1540
  %v1608 = vpop.f32.mrf.mxu0
  %v1609 = vadd.f32 0.0, %v1608
  %v1610 = vpop.f32.mrf.mxu0
  %1611 = vdwg.mxu0
  %1613 = vrot.lane.b32.xlu0 %v1609, 80
  %v1614 = vpop.permute.xlu0 %1613
  %vm1616 = vcmask 778880
  %1617 = vst.msk [vmem:[%s8] sm:$0x1] %vm1616, %v1614
  %s1618 = scalar_lea.vmem %s0, 6
  %v1619 = vld [vmem:[%s1618] sm:$0x1]
  %v1620 = vadd.s32 %v1619, 16
  %1621 = vset.pattern.permute.xlu0 0
  %1622 = vperm.xlu0 %1621, %v1619
  %v1623 = vpop.permute.xlu0 %1622
  %v1624 = vlaneseq
  %v1625 = vshrl.u32 %v1624, 7
  %v1626 = vsub.s32 0, %v1625
  %v1627 = vrot.slane %v1623, %v1626
  %vm1628 = vcmp.eq.s32.totalorder %v56, %v1627
  %1629 = vset.pattern.permute.xlu0 1
  %1630 = vperm.xlu0 %1629, %v1620
  %v1631 = vpop.permute.xlu0 %1630
  %v1632 = vlaneseq
  %v1633 = vshrl.u32 %v1632, 7
  %v1634 = vsub.s32 0, %v1633
  %v1635 = vrot.slane %v1631, %v1634
  %vm1636 = vcmp.eq.s32.totalorder %v56, %v1635
  %vm1637 = vmor %vm1628, %vm1636
  %v1638 = vsel %vm1637, 1, 0
  %v1639 = vcvt.s32.f32 %v1638
  %v1640 = vpack.c.bf16 %v1639, %v1639
  %v1642 = vsel %vm88, %v1640, 0
  %1644 = vmatprep.subr.bf16.mxu0 0
  %1645 = vmatpush1.bf16.msra.mxu0 0
  %1646 = vmatprep.subr.bf16.mxu0 0
  %1647 = vmatpush1.bf16.msra.mxu0 0
  %1648 = vmatprep.subr.bf16.mxu0 0
  %1649 = vmatpush1.bf16.msra.mxu0 0
  %1650 = vmatprep.subr.bf16.mxu0 0
  %1651 = vmatpush1.bf16.msra.mxu0 0
  %1652 = vmatprep.subr.bf16.mxu0 0
  %1653 = vmatpush1.bf16.msra.mxu0 0
  %1654 = vmatprep.subr.bf16.mxu0 0
  %1655 = vmatpush1.bf16.msra.mxu0 0
  %1656 = vmatprep.subr.bf16.mxu0 0
  %1657 = vmatpush1.bf16.msra.mxu0 %v94
  %1658 = vmatprep.subr.bf16.mxu0 0
  %1659 = vmatpush1.bf16.msra.mxu0 %v85
  %1660 = vmatprep.subr.bf16.mxu0 0
  %1661 = vmatpush2.bf16.msra.mxu0 0
  %1662 = vmatprep.subr.bf16.mxu0 0
  %1663 = vmatpush2.bf16.msra.mxu0 0
  %1664 = vmatprep.subr.bf16.mxu0 0
  %1665 = vmatpush2.bf16.msra.mxu0 0
  %1666 = vmatprep.subr.bf16.mxu0 0
  %1667 = vmatpush2.bf16.msra.mxu0 0
  %1668 = vmatprep.subr.bf16.mxu0 0
  %1669 = vmatpush2.bf16.msra.mxu0 0
  %1670 = vmatprep.subr.bf16.mxu0 0
  %1671 = vmatpush2.bf16.msra.mxu0 0
  %1672 = vmatprep.subr.bf16.mxu0 0
  %1673 = vmatpush2.bf16.msra.mxu0 0
  %1674 = vmatprep.subr.bf16.mxu0 0
  %1675 = vmatpush2.bf16.msra.mxu0 0
  %1676 = vmatprep.mubr.bf16.mxu0 0
  %1677 = vmatmul.mubr.bf16.gmra.mxu0 %v1642
  %v1678 = vpop.f32.mrf.mxu0
  %v1679 = vadd.f32 %v33, %v1678
  %v1680 = vpop.f32.mrf.mxu0
  %v1681 = vpop.f32.mrf.mxu0
  %v1682 = vpop.f32.mrf.mxu0
  %1683 = vdwg.mxu0
  %v1684 = vmax.f32 %v1679, 0.0
  %v1685 = vpack.c.bf16 %v1684, %v1684
  %v1687 = vsel %vm183, %v1685, 0
  %1689 = vmatprep.subr.bf16.mxu0 0
  %1690 = vmatpush1.bf16.msra.mxu0 %v189
  %1691 = vmatprep.subr.bf16.mxu0 0
  %1692 = vmatpush1.bf16.msra.mxu0 %v174
  %1693 = vmatprep.subr.bf16.mxu0 0
  %1694 = vmatpush1.bf16.msra.mxu0 %v173
  %1695 = vmatprep.subr.bf16.mxu0 0
  %1696 = vmatpush1.bf16.msra.mxu0 %v172
  %1697 = vmatprep.subr.bf16.mxu0 0
  %1698 = vmatpush1.bf16.msra.mxu0 %v171
  %1699 = vmatprep.subr.bf16.mxu0 0
  %1700 = vmatpush1.bf16.msra.mxu0 %v170
  %1701 = vmatprep.subr.bf16.mxu0 0
  %1702 = vmatpush1.bf16.msra.mxu0 %v169
  %1703 = vmatprep.subr.bf16.mxu0 0
  %1704 = vmatpush1.bf16.msra.mxu0 %v168
  %1705 = vmatprep.subr.bf16.mxu0 0
  %1706 = vmatpush2.bf16.msra.mxu0 0
  %1707 = vmatprep.subr.bf16.mxu0 0
  %1708 = vmatpush2.bf16.msra.mxu0 0
  %1709 = vmatprep.subr.bf16.mxu0 0
  %1710 = vmatpush2.bf16.msra.mxu0 0
  %1711 = vmatprep.subr.bf16.mxu0 0
  %1712 = vmatpush2.bf16.msra.mxu0 0
  %1713 = vmatprep.subr.bf16.mxu0 0
  %1714 = vmatpush2.bf16.msra.mxu0 0
  %1715 = vmatprep.subr.bf16.mxu0 0
  %1716 = vmatpush2.bf16.msra.mxu0 0
  %1717 = vmatprep.subr.bf16.mxu0 0
  %1718 = vmatpush2.bf16.msra.mxu0 0
  %1719 = vmatprep.subr.bf16.mxu0 0
  %1720 = vmatpush2.bf16.msra.mxu0 0
  %1721 = vmatprep.mubr.bf16.mxu0 0
  %1722 = vmatmul.mubr.bf16.gmra.mxu0 %v1687
  %v1723 = vpop.f32.mrf.mxu0
  %v1724 = vadd.f32 %v49, %v1723
  %v1725 = vpop.f32.mrf.mxu0
  %v1726 = vpop.f32.mrf.mxu0
  %v1727 = vpop.f32.mrf.mxu0
  %1728 = vdwg.mxu0
  %vm1729 = vcmp.ge.f32.partialorder %v1724, 0.0
  %v1730 = vmul.f32 %v1724, 0.01
  %v1731 = vsel %vm1729, %v1724, %v1730
  %v1732 = vpack.c.bf16 %v1731, %v1731
  %v1734 = vsel %vm88, %v1732, 0
  %1736 = vmatprep.subr.bf16.mxu0 0
  %1737 = vmatpush1.bf16.msra.mxu0 0
  %1738 = vmatprep.subr.bf16.mxu0 0
  %1739 = vmatpush1.bf16.msra.mxu0 0
  %1740 = vmatprep.subr.bf16.mxu0 0
  %1741 = vmatpush1.bf16.msra.mxu0 0
  %1742 = vmatprep.subr.bf16.mxu0 0
  %1743 = vmatpush1.bf16.msra.mxu0 0
  %1744 = vmatprep.subr.bf16.mxu0 0
  %1745 = vmatpush1.bf16.msra.mxu0 0
  %1746 = vmatprep.subr.bf16.mxu0 0
  %1747 = vmatpush1.bf16.msra.mxu0 0
  %1748 = vmatprep.subr.bf16.mxu0 0
  %1749 = vmatpush1.bf16.msra.mxu0 %v248
  %1750 = vmatprep.subr.bf16.mxu0 0
  %1751 = vmatpush1.bf16.msra.mxu0 %v241
  %1752 = vmatprep.subr.bf16.mxu0 0
  %1753 = vmatpush2.bf16.msra.mxu0 0
  %1754 = vmatprep.subr.bf16.mxu0 0
  %1755 = vmatpush2.bf16.msra.mxu0 0
  %1756 = vmatprep.subr.bf16.mxu0 0
  %1757 = vmatpush2.bf16.msra.mxu0 0
  %1758 = vmatprep.subr.bf16.mxu0 0
  %1759 = vmatpush2.bf16.msra.mxu0 0
  %1760 = vmatprep.subr.bf16.mxu0 0
  %1761 = vmatpush2.bf16.msra.mxu0 0
  %1762 = vmatprep.subr.bf16.mxu0 0
  %1763 = vmatpush2.bf16.msra.mxu0 0
  %1764 = vmatprep.subr.bf16.mxu0 0
  %1765 = vmatpush2.bf16.msra.mxu0 0
  %1766 = vmatprep.subr.bf16.mxu0 0
  %1767 = vmatpush2.bf16.msra.mxu0 0
  %1768 = vmatprep.mubr.bf16.mxu0 0
  %1769 = vmatmul.mubr.bf16.gmra.mxu0 %v1734
  %v1770 = vpop.f32.mrf.mxu0
  %v1771 = vadd.f32 %v53, %v1770
  %v1772 = vpop.f32.mrf.mxu0
  %v1773 = vpop.f32.mrf.mxu0
  %v1774 = vpop.f32.mrf.mxu0
  %1775 = vdwg.mxu0
  %v1776 = vsel %vm290, %v1771, -inf
  %1777 = vmax.xlane.f32.xlu0 %v1776
  %v1778 = vpop.xlane.xlu0 %1777
  %v1779 = vsub.f32 %v1771, %v1778
  %v1780 = vmul.f32 %v1779, 1.442695
  %v1781 = vpow.pop %v1780
  %v1782 = vsel %vm290, %v1781, 0.0
  %1783 = vadd.xlane.f32.xlu0 %v1782
  %v1784 = vpop.xlane.xlu0 %1783
  %v1785 = vrcp.pop %v1784
  %v1786 = vmul.f32 %v1781, %v1785
  %v1788 = vsel %vm302, %v1786, 0
  %1790 = vmatprep.subr.mxu0 0.0
  %1791 = vmatpush1.msra.mxu0 0.0
  %1792 = vmatprep.subr.mxu0 0.0
  %1793 = vmatpush1.msra.mxu0 0.0
  %1794 = vmatprep.subr.mxu0 0.0
  %1795 = vmatpush1.msra.mxu0 0.0
  %1796 = vmatprep.subr.mxu0 0.0
  %1797 = vmatpush1.msra.mxu0 0.0
  %1798 = vmatprep.subr.mxu0 0.0
  %1799 = vmatpush1.msra.mxu0 0.0
  %1800 = vmatprep.subr.mxu0 0.0
  %1801 = vmatpush1.msra.mxu0 0.0
  %1802 = vmatprep.subr.mxu0 0.0
  %1803 = vmatpush1.msra.mxu0 0.0
  %1804 = vmatprep.subr.mxu0 0.0
  %1805 = vmatpush1.msra.mxu0 0.0
  %1806 = vmatprep.subr.mxu0 0.0
  %1807 = vmatpush1.msra.mxu0 0.0
  %1808 = vmatprep.subr.mxu0 0.0
  %1809 = vmatpush1.msra.mxu0 0.0
  %1810 = vmatprep.subr.mxu0 0.0
  %1811 = vmatpush1.msra.mxu0 0.0
  %1812 = vmatprep.subr.mxu0 0.0
  %1813 = vmatpush1.msra.mxu0 0.0
  %1814 = vmatprep.subr.mxu0 0.0
  %1815 = vmatpush1.msra.mxu0 0.0
  %1816 = vmatprep.subr.mxu0 0.0
  %1817 = vmatpush1.msra.mxu0 0.0
  %1818 = vmatprep.subr.mxu0 0.0
  %1819 = vmatpush1.msra.mxu0 0.0
  %1820 = vmatprep.subr.mxu0 0.0
  %1821 = vmatpush1.msra.mxu0 %v54
  %1822 = vmatprep.subr.mxu0 0.0
  %1823 = vmatpush2.msra.mxu0 0.0
  %1824 = vmatprep.subr.mxu0 0.0
  %1825 = vmatpush2.msra.mxu0 0.0
  %1826 = vmatprep.subr.mxu0 0.0
  %1827 = vmatpush2.msra.mxu0 0.0
  %1828 = vmatprep.subr.mxu0 0.0
  %1829 = vmatpush2.msra.mxu0 0.0
  %1830 = vmatprep.subr.mxu0 0.0
  %1831 = vmatpush2.msra.mxu0 0.0
  %1832 = vmatprep.subr.mxu0 0.0
  %1833 = vmatpush2.msra.mxu0 0.0
  %1834 = vmatprep.subr.mxu0 0.0
  %1835 = vmatpush2.msra.mxu0 0.0
  %1836 = vmatprep.subr.mxu0 0.0
  %1837 = vmatpush2.msra.mxu0 0.0
  %1838 = vmatprep.subr.mxu0 0.0
  %1839 = vmatpush2.msra.mxu0 0.0
  %1840 = vmatprep.subr.mxu0 0.0
  %1841 = vmatpush2.msra.mxu0 0.0
  %1842 = vmatprep.subr.mxu0 0.0
  %1843 = vmatpush2.msra.mxu0 0.0
  %1844 = vmatprep.subr.mxu0 0.0
  %1845 = vmatpush2.msra.mxu0 0.0
  %1846 = vmatprep.subr.mxu0 0.0
  %1847 = vmatpush2.msra.mxu0 0.0
  %1848 = vmatprep.subr.mxu0 0.0
  %1849 = vmatpush2.msra.mxu0 0.0
  %1850 = vmatprep.subr.mxu0 0.0
  %1851 = vmatpush2.msra.mxu0 0.0
  %1852 = vmatprep.subr.mxu0 0.0
  %1853 = vmatpush2.msra.mxu0 0.0
  %1854 = vmatprep.mubr.f32.mxu0 0.0
  %1855 = vmatmul.mubr.f32.gmra.mxu0 %v1788
  %v1856 = vpop.f32.mrf.mxu0
  %v1857 = vadd.f32 0.0, %v1856
  %v1858 = vpop.f32.mrf.mxu0
  %1859 = vdwg.mxu0
  %1861 = vrot.lane.b32.xlu0 %v1857, 96
  %v1862 = vpop.permute.xlu0 %1861
  %vm1864 = vcmask 910080
  %1865 = vst.msk [vmem:[%s8] sm:$0x1] %vm1864, %v1862
  %s1866 = scalar_lea.vmem %s0, 7
  %v1867 = vld [vmem:[%s1866] sm:$0x1]
  %v1868 = vadd.s32 %v1867, 16
  %1869 = vset.pattern.permute.xlu0 0
  %1870 = vperm.xlu0 %1869, %v1867
  %v1871 = vpop.permute.xlu0 %1870
  %v1872 = vlaneseq
  %v1873 = vshrl.u32 %v1872, 7
  %v1874 = vsub.s32 0, %v1873
  %v1875 = vrot.slane %v1871, %v1874
  %vm1876 = vcmp.eq.s32.totalorder %v56, %v1875
  %1877 = vset.pattern.permute.xlu0 1
  %1878 = vperm.xlu0 %1877, %v1868
  %v1879 = vpop.permute.xlu0 %1878
  %v1880 = vlaneseq
  %v1881 = vshrl.u32 %v1880, 7
  %v1882 = vsub.s32 0, %v1881
  %v1883 = vrot.slane %v1879, %v1882
  %vm1884 = vcmp.eq.s32.totalorder %v56, %v1883
  %vm1885 = vmor %vm1876, %vm1884
  %v1886 = vsel %vm1885, 1, 0
  %v1887 = vcvt.s32.f32 %v1886
  %v1888 = vpack.c.bf16 %v1887, %v1887
  %v1890 = vsel %vm88, %v1888, 0
  %1892 = vmatprep.subr.bf16.mxu0 0
  %1893 = vmatpush1.bf16.msra.mxu0 0
  %1894 = vmatprep.subr.bf16.mxu0 0
  %1895 = vmatpush1.bf16.msra.mxu0 0
  %1896 = vmatprep.subr.bf16.mxu0 0
  %1897 = vmatpush1.bf16.msra.mxu0 0
  %1898 = vmatprep.subr.bf16.mxu0 0
  %1899 = vmatpush1.bf16.msra.mxu0 0
  %1900 = vmatprep.subr.bf16.mxu0 0
  %1901 = vmatpush1.bf16.msra.mxu0 0
  %1902 = vmatprep.subr.bf16.mxu0 0
  %1903 = vmatpush1.bf16.msra.mxu0 0
  %1904 = vmatprep.subr.bf16.mxu0 0
  %1905 = vmatpush1.bf16.msra.mxu0 %v94
  %1906 = vmatprep.subr.bf16.mxu0 0
  %1907 = vmatpush1.bf16.msra.mxu0 %v85
  %1908 = vmatprep.subr.bf16.mxu0 0
  %1909 = vmatpush2.bf16.msra.mxu0 0
  %1910 = vmatprep.subr.bf16.mxu0 0
  %1911 = vmatpush2.bf16.msra.mxu0 0
  %1912 = vmatprep.subr.bf16.mxu0 0
  %1913 = vmatpush2.bf16.msra.mxu0 0
  %1914 = vmatprep.subr.bf16.mxu0 0
  %1915 = vmatpush2.bf16.msra.mxu0 0
  %1916 = vmatprep.subr.bf16.mxu0 0
  %1917 = vmatpush2.bf16.msra.mxu0 0
  %1918 = vmatprep.subr.bf16.mxu0 0
  %1919 = vmatpush2.bf16.msra.mxu0 0
  %1920 = vmatprep.subr.bf16.mxu0 0
  %1921 = vmatpush2.bf16.msra.mxu0 0
  %1922 = vmatprep.subr.bf16.mxu0 0
  %1923 = vmatpush2.bf16.msra.mxu0 0
  %1924 = vmatprep.mubr.bf16.mxu0 0
  %1925 = vmatmul.mubr.bf16.gmra.mxu0 %v1890
  %v1926 = vpop.f32.mrf.mxu0
  %v1927 = vadd.f32 %v33, %v1926
  %v1928 = vpop.f32.mrf.mxu0
  %v1929 = vpop.f32.mrf.mxu0
  %v1930 = vpop.f32.mrf.mxu0
  %1931 = vdwg.mxu0
  %v1932 = vmax.f32 %v1927, 0.0
  %v1933 = vpack.c.bf16 %v1932, %v1932
  %v1935 = vsel %vm183, %v1933, 0
  %1937 = vmatprep.subr.bf16.mxu0 0
  %1938 = vmatpush1.bf16.msra.mxu0 %v189
  %1939 = vmatprep.subr.bf16.mxu0 0
  %1940 = vmatpush1.bf16.msra.mxu0 %v174
  %1941 = vmatprep.subr.bf16.mxu0 0
  %1942 = vmatpush1.bf16.msra.mxu0 %v173
  %1943 = vmatprep.subr.bf16.mxu0 0
  %1944 = vmatpush1.bf16.msra.mxu0 %v172
  %1945 = vmatprep.subr.bf16.mxu0 0
  %1946 = vmatpush1.bf16.msra.mxu0 %v171
  %1947 = vmatprep.subr.bf16.mxu0 0
  %1948 = vmatpush1.bf16.msra.mxu0 %v170
  %1949 = vmatprep.subr.bf16.mxu0 0
  %1950 = vmatpush1.bf16.msra.mxu0 %v169
  %1951 = vmatprep.subr.bf16.mxu0 0
  %1952 = vmatpush1.bf16.msra.mxu0 %v168
  %1953 = vmatprep.subr.bf16.mxu0 0
  %1954 = vmatpush2.bf16.msra.mxu0 0
  %1955 = vmatprep.subr.bf16.mxu0 0
  %1956 = vmatpush2.bf16.msra.mxu0 0
  %1957 = vmatprep.subr.bf16.mxu0 0
  %1958 = vmatpush2.bf16.msra.mxu0 0
  %1959 = vmatprep.subr.bf16.mxu0 0
  %1960 = vmatpush2.bf16.msra.mxu0 0
  %1961 = vmatprep.subr.bf16.mxu0 0
  %1962 = vmatpush2.bf16.msra.mxu0 0
  %1963 = vmatprep.subr.bf16.mxu0 0
  %1964 = vmatpush2.bf16.msra.mxu0 0
  %1965 = vmatprep.subr.bf16.mxu0 0
  %1966 = vmatpush2.bf16.msra.mxu0 0
  %1967 = vmatprep.subr.bf16.mxu0 0
  %1968 = vmatpush2.bf16.msra.mxu0 0
  %1969 = vmatprep.mubr.bf16.mxu0 0
  %1970 = vmatmul.mubr.bf16.gmra.mxu0 %v1935
  %v1971 = vpop.f32.mrf.mxu0
  %v1972 = vadd.f32 %v49, %v1971
  %v1973 = vpop.f32.mrf.mxu0
  %v1974 = vpop.f32.mrf.mxu0
  %v1975 = vpop.f32.mrf.mxu0
  %1976 = vdwg.mxu0
  %vm1977 = vcmp.ge.f32.partialorder %v1972, 0.0
  %v1978 = vmul.f32 %v1972, 0.01
  %v1979 = vsel %vm1977, %v1972, %v1978
  %v1980 = vpack.c.bf16 %v1979, %v1979
  %v1982 = vsel %vm88, %v1980, 0
  %1984 = vmatprep.subr.bf16.mxu0 0
  %1985 = vmatpush1.bf16.msra.mxu0 0
  %1986 = vmatprep.subr.bf16.mxu0 0
  %1987 = vmatpush1.bf16.msra.mxu0 0
  %1988 = vmatprep.subr.bf16.mxu0 0
  %1989 = vmatpush1.bf16.msra.mxu0 0
  %1990 = vmatprep.subr.bf16.mxu0 0
  %1991 = vmatpush1.bf16.msra.mxu0 0
  %1992 = vmatprep.subr.bf16.mxu0 0
  %1993 = vmatpush1.bf16.msra.mxu0 0
  %1994 = vmatprep.subr.bf16.mxu0 0
  %1995 = vmatpush1.bf16.msra.mxu0 0
  %1996 = vmatprep.subr.bf16.mxu0 0
  %1997 = vmatpush1.bf16.msra.mxu0 %v248
  %1998 = vmatprep.subr.bf16.mxu0 0
  %1999 = vmatpush1.bf16.msra.mxu0 %v241
  %2000 = vmatprep.subr.bf16.mxu0 0
  %2001 = vmatpush2.bf16.msra.mxu0 0
  %2002 = vmatprep.subr.bf16.mxu0 0
  %2003 = vmatpush2.bf16.msra.mxu0 0
  %2004 = vmatprep.subr.bf16.mxu0 0
  %2005 = vmatpush2.bf16.msra.mxu0 0
  %2006 = vmatprep.subr.bf16.mxu0 0
  %2007 = vmatpush2.bf16.msra.mxu0 0
  %2008 = vmatprep.subr.bf16.mxu0 0
  %2009 = vmatpush2.bf16.msra.mxu0 0
  %2010 = vmatprep.subr.bf16.mxu0 0
  %2011 = vmatpush2.bf16.msra.mxu0 0
  %2012 = vmatprep.subr.bf16.mxu0 0
  %2013 = vmatpush2.bf16.msra.mxu0 0
  %2014 = vmatprep.subr.bf16.mxu0 0
  %2015 = vmatpush2.bf16.msra.mxu0 0
  %2016 = vmatprep.mubr.bf16.mxu0 0
  %2017 = vmatmul.mubr.bf16.gmra.mxu0 %v1982
  %v2018 = vpop.f32.mrf.mxu0
  %v2019 = vadd.f32 %v53, %v2018
  %v2020 = vpop.f32.mrf.mxu0
  %v2021 = vpop.f32.mrf.mxu0
  %v2022 = vpop.f32.mrf.mxu0
  %2023 = vdwg.mxu0
  %v2024 = vsel %vm290, %v2019, -inf
  %2025 = vmax.xlane.f32.xlu0 %v2024
  %v2026 = vpop.xlane.xlu0 %2025
  %v2027 = vsub.f32 %v2019, %v2026
  %v2028 = vmul.f32 %v2027, 1.442695
  %v2029 = vpow.pop %v2028
  %v2030 = vsel %vm290, %v2029, 0.0
  %2031 = vadd.xlane.f32.xlu0 %v2030
  %v2032 = vpop.xlane.xlu0 %2031
  %v2033 = vrcp.pop %v2032
  %v2034 = vmul.f32 %v2029, %v2033
  %v2036 = vsel %vm302, %v2034, 0
  %2038 = vmatprep.subr.mxu0 0.0
  %2039 = vmatpush1.msra.mxu0 0.0
  %2040 = vmatprep.subr.mxu0 0.0
  %2041 = vmatpush1.msra.mxu0 0.0
  %2042 = vmatprep.subr.mxu0 0.0
  %2043 = vmatpush1.msra.mxu0 0.0
  %2044 = vmatprep.subr.mxu0 0.0
  %2045 = vmatpush1.msra.mxu0 0.0
  %2046 = vmatprep.subr.mxu0 0.0
  %2047 = vmatpush1.msra.mxu0 0.0
  %2048 = vmatprep.subr.mxu0 0.0
  %2049 = vmatpush1.msra.mxu0 0.0
  %2050 = vmatprep.subr.mxu0 0.0
  %2051 = vmatpush1.msra.mxu0 0.0
  %2052 = vmatprep.subr.mxu0 0.0
  %2053 = vmatpush1.msra.mxu0 0.0
  %2054 = vmatprep.subr.mxu0 0.0
  %2055 = vmatpush1.msra.mxu0 0.0
  %2056 = vmatprep.subr.mxu0 0.0
  %2057 = vmatpush1.msra.mxu0 0.0
  %2058 = vmatprep.subr.mxu0 0.0
  %2059 = vmatpush1.msra.mxu0 0.0
  %2060 = vmatprep.subr.mxu0 0.0
  %2061 = vmatpush1.msra.mxu0 0.0
  %2062 = vmatprep.subr.mxu0 0.0
  %2063 = vmatpush1.msra.mxu0 0.0
  %2064 = vmatprep.subr.mxu0 0.0
  %2065 = vmatpush1.msra.mxu0 0.0
  %2066 = vmatprep.subr.mxu0 0.0
  %2067 = vmatpush1.msra.mxu0 0.0
  %2068 = vmatprep.subr.mxu0 0.0
  %2069 = vmatpush1.msra.mxu0 %v54
  %2070 = vmatprep.subr.mxu0 0.0
  %2071 = vmatpush2.msra.mxu0 0.0
  %2072 = vmatprep.subr.mxu0 0.0
  %2073 = vmatpush2.msra.mxu0 0.0
  %2074 = vmatprep.subr.mxu0 0.0
  %2075 = vmatpush2.msra.mxu0 0.0
  %2076 = vmatprep.subr.mxu0 0.0
  %2077 = vmatpush2.msra.mxu0 0.0
  %2078 = vmatprep.subr.mxu0 0.0
  %2079 = vmatpush2.msra.mxu0 0.0
  %2080 = vmatprep.subr.mxu0 0.0
  %2081 = vmatpush2.msra.mxu0 0.0
  %2082 = vmatprep.subr.mxu0 0.0
  %2083 = vmatpush2.msra.mxu0 0.0
  %2084 = vmatprep.subr.mxu0 0.0
  %2085 = vmatpush2.msra.mxu0 0.0
  %2086 = vmatprep.subr.mxu0 0.0
  %2087 = vmatpush2.msra.mxu0 0.0
  %2088 = vmatprep.subr.mxu0 0.0
  %2089 = vmatpush2.msra.mxu0 0.0
  %2090 = vmatprep.subr.mxu0 0.0
  %2091 = vmatpush2.msra.mxu0 0.0
  %2092 = vmatprep.subr.mxu0 0.0
  %2093 = vmatpush2.msra.mxu0 0.0
  %2094 = vmatprep.subr.mxu0 0.0
  %2095 = vmatpush2.msra.mxu0 0.0
  %2096 = vmatprep.subr.mxu0 0.0
  %2097 = vmatpush2.msra.mxu0 0.0
  %2098 = vmatprep.subr.mxu0 0.0
  %2099 = vmatpush2.msra.mxu0 0.0
  %2100 = vmatprep.subr.mxu0 0.0
  %2101 = vmatpush2.msra.mxu0 0.0
  %2102 = vmatprep.mubr.f32.mxu0 0.0
  %2103 = vmatmul.mubr.f32.gmra.mxu0 %v2036
  %v2104 = vpop.f32.mrf.mxu0
  %v2105 = vadd.f32 0.0, %v2104
  %v2106 = vpop.f32.mrf.mxu0
  %2107 = vdwg.mxu0
  %2109 = vrot.lane.b32.xlu0 %v2105, 112
  %v2110 = vpop.permute.xlu0 %2109
  %vm2112 = vcmask 1041280
  %2113 = vst.msk [vmem:[%s8] sm:$0x1] %vm2112, %v2110
  // Predicated region
  $region34: #{net_forward.1} parent=0 // pred_check
    _
  $region35: #{net_forward.1} parent=0 // pred_check_branch
    %2115 = sbr.rel (0) target = $region37
  $region36: #{net_forward.1} parent=0 // pred_region
    _
  $region37: #{net_forward.1} parent=0 // pred_fallthru
    _
  // Predicated region
  $region38: #{net_forward.1} parent=0 // pred_check
    _
  $region39: #{net_forward.1} parent=0 // pred_check_branch
    %2117 = sbr.rel (0) target = $region41
  $region40: #{net_forward.1} parent=0 // pred_region
    _
  $region41: #{net_forward.1} parent=0 // pred_fallthru
    _

</llo_original>
